<compile_context>
chip_gen: v7x
topology: tpu7x:2x2x1
jax: 0.10.0
libtpu: 0.0.40
codegen_flags: <defaults>
</compile_context>

<pallas_src>
import functools

import jax
import jax.numpy as jnp
from jax.experimental import pallas as pl
from jax.experimental.pallas import tpu as pltpu


# ----------------------------------------------------------------------------
# Fused forward kernel.
# refs layout (after x_ref, lbl_ref):
#   [We_0, be_0, ..., We_{ne-1}, be_{ne-1},          # encoder linears
#    Wd0_z, Wd0_onehot, bd_0,                        # decoder layer 0 (split W)
#    Wd_1, bd_1, ..., Wd_{nd-1}, bd_{nd-1},          # remaining decoder linears
#    enc_out_ref, dec_out_ref]                       # outputs
# ----------------------------------------------------------------------------
def _fused_forward_kernel(x_ref, lbl_ref, *refs, n_enc, n_dec, num_classes):
    f32 = jnp.float32

    enc_refs = refs[: 2 * n_enc]
    wz_ref, wl_ref, bd0_ref = refs[2 * n_enc: 2 * n_enc + 3]
    dec_rest = refs[2 * n_enc + 3: 2 * n_enc + 3 + 2 * (n_dec - 1)]
    enc_out_ref, dec_out_ref = refs[-2:]

    # ---------------- encoder ----------------
    h = x_ref[...].astype(f32)
    for i in range(n_enc):
        w = enc_refs[2 * i][...]
        b = enc_refs[2 * i + 1][...]
        h = jnp.dot(h, w, preferred_element_type=f32) + b
        if i < n_enc - 1:                       # hidden layers: ReLU
            h = jnp.maximum(h, 0.0)
    encoded = h                                 # (TB, latent)
    enc_out_ref[...] = encoded.astype(enc_out_ref.dtype)

    # ------------- one-hot(labels) -------------
    lbl = lbl_ref[...]                          # (TB, 1) int32
    tb = lbl.shape[0]
    classes = jax.lax.broadcasted_iota(jnp.int32, (tb, num_classes), 1)
    onehot = (classes == lbl).astype(f32)       # (TB, num_classes)

    # ---------------- decoder ----------------
    # layer 0: concat([encoded, onehot]) @ Wd0  ==  enc @ Wz + onehot @ Wl
    h = (jnp.dot(encoded, wz_ref[...], preferred_element_type=f32)
         + jnp.dot(onehot, wl_ref[...], preferred_element_type=f32)
         + bd0_ref[...])
    if n_dec > 1:
        h = jnp.maximum(h, 0.0)
    for i in range(1, n_dec):
        w = dec_rest[2 * (i - 1)][...]
        b = dec_rest[2 * (i - 1) + 1][...]
        h = jnp.dot(h, w, preferred_element_type=f32) + b
        if i < n_dec - 1:
            h = jnp.maximum(h, 0.0)

    # final Sigmoid: exp + approx reciprocal (both hit the EUP slot)
    dec = pl.reciprocal(1.0 + jnp.exp(-h), approx=True)
    dec_out_ref[...] = dec.astype(dec_out_ref.dtype)


# ----------------------------------------------------------------------------
# Wrapper: one pallas_call for the whole forward pass.
# ----------------------------------------------------------------------------
def autoencoder_forward(params, x, labels, *, batch_tile=256, num_classes=10):
    B, d_in = x.shape
    enc = params["encoder"]
    dec = params["decoder"]
    n_enc, n_dec = len(enc), len(dec)
    latent_dim = enc[-1][0].shape[1]
    d_out = dec[-1][0].shape[1]

    # Pick a batch tile: a multiple of 8 that divides B, else one full-B block.
    tb = B
    for cand in (batch_tile, 512, 256, 128, 64, 32, 16, 8):
        if cand <= B and B % cand == 0:
            tb = cand
            break
    grid = (B // tb,)

    lbl2 = labels.reshape(B, 1).astype(jnp.int32)

    # Flatten weights; split decoder layer-0 weight into [latent | one_hot] rows.
    flat_inputs = []
    in_specs = [
        pl.BlockSpec((tb, d_in), lambda i: (i, 0)),   # x: streamed per batch tile
        pl.BlockSpec((tb, 1), lambda i: (i, 0)),      # labels
    ]

    def add_resident(arr):
        flat_inputs.append(arr)
        in_specs.append(pl.BlockSpec(arr.shape, lambda i: (0, 0)))  # VMEM-resident

    for w, b in enc:
        add_resident(w)
        add_resident(b.reshape(1, -1))

    wd0, bd0 = dec[0]
    add_resident(wd0[:latent_dim])          # Wz  (latent, D0)
    add_resident(wd0[latent_dim:])          # Wl  (num_classes, D0)
    add_resident(bd0.reshape(1, -1))
    for w, b in dec[1:]:
        add_resident(w)
        add_resident(b.reshape(1, -1))

    kernel = functools.partial(
        _fused_forward_kernel,
        n_enc=n_enc, n_dec=n_dec, num_classes=num_classes)

    encoded, decoded = pl.pallas_call(
        kernel,
        grid=grid,
        in_specs=in_specs,
        out_specs=[
            pl.BlockSpec((tb, latent_dim), lambda i: (i, 0)),
            pl.BlockSpec((tb, d_out), lambda i: (i, 0)),
        ],
        out_shape=[
            jax.ShapeDtypeStruct((B, latent_dim), x.dtype),
            jax.ShapeDtypeStruct((B, d_out), x.dtype),
        ],
        compiler_params=pltpu.CompilerParams(
            dimension_semantics=("parallel",)),
    )(x, lbl2, *flat_inputs)
    return encoded, decoded


# ----------------------------------------------------------------------------
# Parameter construction (mimics torch.nn.Linear default init:
# U(-1/sqrt(fan_in), 1/sqrt(fan_in)) for weight and bias).
# ----------------------------------------------------------------------------
def _init_linear(key, fan_in, fan_out, dtype=jnp.float32):
    kw, kb = jax.random.split(key)
    bound = 1.0 / jnp.sqrt(jnp.asarray(fan_in, dtype))
    w = jax.random.uniform(kw, (fan_in, fan_out), dtype, -bound, bound)
    b = jax.random.uniform(kb, (fan_out,), dtype, -bound, bound)
    return w, b


def init_autoencoder_params(key, encoder_layers, decoder_layers, latent_dim):
    params = {"encoder": [], "decoder": []}
    in_size = 784
    for layer_size in encoder_layers:
        key, sub = jax.random.split(key)
        params["encoder"].append(_init_linear(sub, in_size, layer_size))
        in_size = layer_size
    key, sub = jax.random.split(key)
    params["encoder"].append(_init_linear(sub, in_size, latent_dim))

    in_size = latent_dim + 10
    for layer_size in decoder_layers:
        key, sub = jax.random.split(key)
        params["decoder"].append(_init_linear(sub, in_size, layer_size))
        in_size = layer_size
    key, sub = jax.random.split(key)
    params["decoder"].append(_init_linear(sub, in_size, 784))
    return params


# ----------------------------------------------------------------------------
# Pure-JAX reference (matches the PyTorch module semantics) for validation.
# ----------------------------------------------------------------------------
def reference_forward(params, x, labels):
    hp = jax.lax.Precision.HIGHEST
    h = x
    enc = params["encoder"]
    for i, (w, b) in enumerate(enc):
        h = jnp.dot(h, w, precision=hp) + b
        if i < len(enc) - 1:
            h = jnp.maximum(h, 0.0)
    encoded = h
    onehot = jax.nn.one_hot(labels, 10, dtype=x.dtype)
    h = jnp.concatenate([encoded, onehot], axis=1)
    dec = params["decoder"]
    for i, (w, b) in enumerate(dec):
        h = jnp.dot(h, w, precision=hp) + b
        if i < len(dec) - 1:
            h = jnp.maximum(h, 0.0)
    decoded = jax.nn.sigmoid(h)
    return encoded, decoded


if __name__ == "__main__":
    key = jax.random.PRNGKey(0)

    batch = 64                       # small demo batch; tiled as 2 x 32
    encoder_layers = [128, 64]
    decoder_layers = [64, 128]
    latent_dim = 32

    kp, kx, kl = jax.random.split(key, 3)
    params = init_autoencoder_params(kp, encoder_layers, decoder_layers, latent_dim)

    x = jax.random.uniform(kx, (batch, 784), jnp.float32)          # flattened 28x28
    labels = jax.random.randint(kl, (batch,), 0, 10, jnp.int32)    # class ids

    fwd = jax.jit(functools.partial(autoencoder_forward, batch_tile=32))
    encoded, decoded = fwd(params, x, labels)
    jax.block_until_ready((encoded, decoded))

    assert encoded.shape == (batch, latent_dim)
    assert decoded.shape == (batch, 784)

    enc_ref, dec_ref = reference_forward(params, x, labels)
    assert float(jnp.max(jnp.abs(encoded - enc_ref))) < 5e-3, "encoded mismatch"
    assert float(jnp.max(jnp.abs(decoded - dec_ref))) < 5e-3, "decoded mismatch"

    print("KERNEL_OK")
</pallas_src>

<mosaic_0001>
module attributes {stable_mosaic.version = 11 : i64} {
  func.func @_fused_forward_kernel(%arg0: i32, %arg1: memref<32x784xf32, #tpu.memory_space<vmem>>, %arg2: memref<32x1xi32, #tpu.memory_space<vmem>>, %arg3: memref<784x128xf32, #tpu.memory_space<vmem>>, %arg4: memref<1x128xf32, #tpu.memory_space<vmem>>, %arg5: memref<128x64xf32, #tpu.memory_space<vmem>>, %arg6: memref<1x64xf32, #tpu.memory_space<vmem>>, %arg7: memref<64x32xf32, #tpu.memory_space<vmem>>, %arg8: memref<1x32xf32, #tpu.memory_space<vmem>>, %arg9: memref<32x64xf32, #tpu.memory_space<vmem>>, %arg10: memref<10x64xf32, #tpu.memory_space<vmem>>, %arg11: memref<1x64xf32, #tpu.memory_space<vmem>>, %arg12: memref<64x128xf32, #tpu.memory_space<vmem>>, %arg13: memref<1x128xf32, #tpu.memory_space<vmem>>, %arg14: memref<128x784xf32, #tpu.memory_space<vmem>>, %arg15: memref<1x784xf32, #tpu.memory_space<vmem>>, %arg16: memref<32x32xf32, #tpu.memory_space<vmem>>, %arg17: memref<32x784xf32, #tpu.memory_space<vmem>>) attributes {dimension_semantics = [#tpu.dimension_semantics<parallel>], iteration_bounds = array<i64: 2>, scalar_prefetch = 0 : i64, scratch_operands = 0 : i64, tpu.core_type = #tpu.core_type<tc>, window_params = [{transform_indices = @transform_0, window_bounds = array<i64: 32, 784>}, {transform_indices = @transform_1, window_bounds = array<i64: 32, 1>}, {pipeline_mode = #tpu.pipeline_mode<synchronous>, transform_indices = @transform_2, window_bounds = array<i64: 784, 128>}, {pipeline_mode = #tpu.pipeline_mode<synchronous>, transform_indices = @transform_3, window_bounds = array<i64: 1, 128>}, {pipeline_mode = #tpu.pipeline_mode<synchronous>, transform_indices = @transform_4, window_bounds = array<i64: 128, 64>}, {pipeline_mode = #tpu.pipeline_mode<synchronous>, transform_indices = @transform_5, window_bounds = array<i64: 1, 64>}, {pipeline_mode = #tpu.pipeline_mode<synchronous>, transform_indices = @transform_6, window_bounds = array<i64: 64, 32>}, {pipeline_mode = #tpu.pipeline_mode<synchronous>, transform_indices = @transform_7, window_bounds = array<i64: 1, 32>}, {pipeline_mode = #tpu.pipeline_mode<synchronous>, transform_indices = @transform_8, window_bounds = array<i64: 32, 64>}, {pipeline_mode = #tpu.pipeline_mode<synchronous>, transform_indices = @transform_9, window_bounds = array<i64: 10, 64>}, {pipeline_mode = #tpu.pipeline_mode<synchronous>, transform_indices = @transform_10, window_bounds = array<i64: 1, 64>}, {pipeline_mode = #tpu.pipeline_mode<synchronous>, transform_indices = @transform_11, window_bounds = array<i64: 64, 128>}, {pipeline_mode = #tpu.pipeline_mode<synchronous>, transform_indices = @transform_12, window_bounds = array<i64: 1, 128>}, {pipeline_mode = #tpu.pipeline_mode<synchronous>, transform_indices = @transform_13, window_bounds = array<i64: 128, 784>}, {pipeline_mode = #tpu.pipeline_mode<synchronous>, transform_indices = @transform_14, window_bounds = array<i64: 1, 784>}, {transform_indices = @transform_15, window_bounds = array<i64: 32, 32>}, {transform_indices = @transform_16, window_bounds = array<i64: 32, 784>}]} {
    %c0 = arith.constant 0 : index
    %c0_0 = arith.constant 0 : index
    %0 = vector.load %arg1[%c0, %c0_0] : memref<32x784xf32, #tpu.memory_space<vmem>>, vector<32x784xf32>
    %c0_1 = arith.constant 0 : index
    %c0_2 = arith.constant 0 : index
    %1 = vector.load %arg3[%c0_1, %c0_2] : memref<784x128xf32, #tpu.memory_space<vmem>>, vector<784x128xf32>
    %c0_3 = arith.constant 0 : index
    %c0_4 = arith.constant 0 : index
    %2 = vector.load %arg4[%c0_3, %c0_4] : memref<1x128xf32, #tpu.memory_space<vmem>>, vector<1x128xf32>
    %cst = arith.constant dense<0.000000e+00> : vector<32x128xf32>
    %3 = tpu.matmul %0, %1, %cst {dimension_numbers = #tpu.dot_dimension_numbers<[1], [0], [0], [1], [0, 0, 1, 1], [], []>} : vector<32x784xf32>, vector<784x128xf32>, vector<32x128xf32> -> vector<32x128xf32>
    %4 = vector.broadcast %2 : vector<1x128xf32> to vector<32x128xf32>
    %5 = arith.addf %3, %4 : vector<32x128xf32>
    %cst_5 = arith.constant 0.000000e+00 : f32
    %6 = vector.broadcast %cst_5 : f32 to vector<32x128xf32>
    %7 = arith.maximumf %5, %6 : vector<32x128xf32>
    %c0_6 = arith.constant 0 : index
    %c0_7 = arith.constant 0 : index
    %8 = vector.load %arg5[%c0_6, %c0_7] : memref<128x64xf32, #tpu.memory_space<vmem>>, vector<128x64xf32>
    %c0_8 = arith.constant 0 : index
    %c0_9 = arith.constant 0 : index
    %9 = vector.load %arg6[%c0_8, %c0_9] : memref<1x64xf32, #tpu.memory_space<vmem>>, vector<1x64xf32>
    %cst_10 = arith.constant dense<0.000000e+00> : vector<32x64xf32>
    %10 = tpu.matmul %7, %8, %cst_10 {dimension_numbers = #tpu.dot_dimension_numbers<[1], [0], [0], [1], [0, 0, 1, 1], [], []>} : vector<32x128xf32>, vector<128x64xf32>, vector<32x64xf32> -> vector<32x64xf32>
    %11 = vector.broadcast %9 : vector<1x64xf32> to vector<32x64xf32>
    %12 = arith.addf %10, %11 : vector<32x64xf32>
    %cst_11 = arith.constant 0.000000e+00 : f32
    %13 = vector.broadcast %cst_11 : f32 to vector<32x64xf32>
    %14 = arith.maximumf %12, %13 : vector<32x64xf32>
    %c0_12 = arith.constant 0 : index
    %c0_13 = arith.constant 0 : index
    %15 = vector.load %arg7[%c0_12, %c0_13] : memref<64x32xf32, #tpu.memory_space<vmem>>, vector<64x32xf32>
    %c0_14 = arith.constant 0 : index
    %c0_15 = arith.constant 0 : index
    %16 = vector.load %arg8[%c0_14, %c0_15] : memref<1x32xf32, #tpu.memory_space<vmem>>, vector<1x32xf32>
    %cst_16 = arith.constant dense<0.000000e+00> : vector<32x32xf32>
    %17 = tpu.matmul %14, %15, %cst_16 {dimension_numbers = #tpu.dot_dimension_numbers<[1], [0], [0], [1], [0, 0, 1, 1], [], []>} : vector<32x64xf32>, vector<64x32xf32>, vector<32x32xf32> -> vector<32x32xf32>
    %18 = vector.broadcast %16 : vector<1x32xf32> to vector<32x32xf32>
    %19 = arith.addf %17, %18 : vector<32x32xf32>
    %c0_17 = arith.constant 0 : index
    %c0_18 = arith.constant 0 : index
    %20 = vector.load %arg16[%c0_17, %c0_18] : memref<32x32xf32, #tpu.memory_space<vmem>>, vector<32x32xf32>
    tpu.vector_store %arg16[%c0_17, %c0_18], %19 {strides = array<i32>} : memref<32x32xf32, #tpu.memory_space<vmem>>, vector<32x32xf32>,
    %c0_19 = arith.constant 0 : index
    %c0_20 = arith.constant 0 : index
    %21 = vector.load %arg2[%c0_19, %c0_20] : memref<32x1xi32, #tpu.memory_space<vmem>>, vector<32x1xi32>
    %22 = tpu.iota {dimensions = array<i32: 1>} : vector<32x10xi32>
    %23 = vector.broadcast %21 : vector<32x1xi32> to vector<32x10xi32>
    %24 = arith.cmpi eq, %22, %23 : vector<32x10xi32>
    %25 = arith.extui %24 : vector<32x10xi1> to vector<32x10xi32>
    %26 = arith.sitofp %25 : vector<32x10xi32> to vector<32x10xf32>
    %c0_21 = arith.constant 0 : index
    %c0_22 = arith.constant 0 : index
    %27 = vector.load %arg9[%c0_21, %c0_22] : memref<32x64xf32, #tpu.memory_space<vmem>>, vector<32x64xf32>
    %cst_23 = arith.constant dense<0.000000e+00> : vector<32x64xf32>
    %28 = tpu.matmul %19, %27, %cst_23 {dimension_numbers = #tpu.dot_dimension_numbers<[1], [0], [0], [1], [0, 0, 1, 1], [], []>} : vector<32x32xf32>, vector<32x64xf32>, vector<32x64xf32> -> vector<32x64xf32>
    %c0_24 = arith.constant 0 : index
    %c0_25 = arith.constant 0 : index
    %29 = vector.load %arg10[%c0_24, %c0_25] : memref<10x64xf32, #tpu.memory_space<vmem>>, vector<10x64xf32>
    %cst_26 = arith.constant dense<0.000000e+00> : vector<32x64xf32>
    %30 = tpu.matmul %26, %29, %cst_26 {dimension_numbers = #tpu.dot_dimension_numbers<[1], [0], [0], [1], [0, 0, 1, 1], [], []>} : vector<32x10xf32>, vector<10x64xf32>, vector<32x64xf32> -> vector<32x64xf32>
    %31 = arith.addf %28, %30 : vector<32x64xf32>
    %c0_27 = arith.constant 0 : index
    %c0_28 = arith.constant 0 : index
    %32 = vector.load %arg11[%c0_27, %c0_28] : memref<1x64xf32, #tpu.memory_space<vmem>>, vector<1x64xf32>
    %33 = vector.broadcast %32 : vector<1x64xf32> to vector<32x64xf32>
    %34 = arith.addf %31, %33 : vector<32x64xf32>
    %cst_29 = arith.constant 0.000000e+00 : f32
    %35 = vector.broadcast %cst_29 : f32 to vector<32x64xf32>
    %36 = arith.maximumf %34, %35 : vector<32x64xf32>
    %c0_30 = arith.constant 0 : index
    %c0_31 = arith.constant 0 : index
    %37 = vector.load %arg12[%c0_30, %c0_31] : memref<64x128xf32, #tpu.memory_space<vmem>>, vector<64x128xf32>
    %c0_32 = arith.constant 0 : index
    %c0_33 = arith.constant 0 : index
    %38 = vector.load %arg13[%c0_32, %c0_33] : memref<1x128xf32, #tpu.memory_space<vmem>>, vector<1x128xf32>
    %cst_34 = arith.constant dense<0.000000e+00> : vector<32x128xf32>
    %39 = tpu.matmul %36, %37, %cst_34 {dimension_numbers = #tpu.dot_dimension_numbers<[1], [0], [0], [1], [0, 0, 1, 1], [], []>} : vector<32x64xf32>, vector<64x128xf32>, vector<32x128xf32> -> vector<32x128xf32>
    %40 = vector.broadcast %38 : vector<1x128xf32> to vector<32x128xf32>
    %41 = arith.addf %39, %40 : vector<32x128xf32>
    %cst_35 = arith.constant 0.000000e+00 : f32
    %42 = vector.broadcast %cst_35 : f32 to vector<32x128xf32>
    %43 = arith.maximumf %41, %42 : vector<32x128xf32>
    %c0_36 = arith.constant 0 : index
    %c0_37 = arith.constant 0 : index
    %44 = vector.load %arg14[%c0_36, %c0_37] : memref<128x784xf32, #tpu.memory_space<vmem>>, vector<128x784xf32>
    %c0_38 = arith.constant 0 : index
    %c0_39 = arith.constant 0 : index
    %45 = vector.load %arg15[%c0_38, %c0_39] : memref<1x784xf32, #tpu.memory_space<vmem>>, vector<1x784xf32>
    %cst_40 = arith.constant dense<0.000000e+00> : vector<32x784xf32>
    %46 = tpu.matmul %43, %44, %cst_40 {dimension_numbers = #tpu.dot_dimension_numbers<[1], [0], [0], [1], [0, 0, 1, 1], [], []>} : vector<32x128xf32>, vector<128x784xf32>, vector<32x784xf32> -> vector<32x784xf32>
    %47 = vector.broadcast %45 : vector<1x784xf32> to vector<32x784xf32>
    %48 = arith.addf %46, %47 : vector<32x784xf32>
    %cst_41 = arith.constant 0.000000e+00 : f32
    %49 = vector.broadcast %cst_41 : f32 to vector<32x784xf32>
    %50 = arith.subf %49, %48 : vector<32x784xf32>
    %51 = math.exp %50 : vector<32x784xf32>
    %cst_42 = arith.constant 1.000000e+00 : f32
    %52 = vector.broadcast %cst_42 : f32 to vector<32x784xf32>
    %53 = arith.addf %52, %51 : vector<32x784xf32>
    %54 = tpu.reciprocal %53 {approx = true} : vector<32x784xf32> -> vector<32x784xf32>
    %c0_43 = arith.constant 0 : index
    %c0_44 = arith.constant 0 : index
    %55 = vector.load %arg17[%c0_43, %c0_44] : memref<32x784xf32, #tpu.memory_space<vmem>>, vector<32x784xf32>
    tpu.vector_store %arg17[%c0_43, %c0_44], %54 {strides = array<i32>} : memref<32x784xf32, #tpu.memory_space<vmem>>, vector<32x784xf32>,
    return
  }
  func.func @transform_0(%arg0: i32) -> (i32, i32) {
    %c0_i32 = arith.constant 0 : i32
    %c0_i32_0 = arith.constant 0 : i32
    return %arg0, %c0_i32 : i32, i32
  }
  func.func @transform_1(%arg0: i32) -> (i32, i32) {
    %c0_i32 = arith.constant 0 : i32
    %c0_i32_0 = arith.constant 0 : i32
    return %arg0, %c0_i32 : i32, i32
  }
  func.func @transform_2(%arg0: i32) -> (i32, i32) {
    %c0_i32 = arith.constant 0 : i32
    %c0_i32_0 = arith.constant 0 : i32
    %c0_i32_1 = arith.constant 0 : i32
    return %c0_i32, %c0_i32_0 : i32, i32
  }
  func.func @transform_3(%arg0: i32) -> (i32, i32) {
    %c0_i32 = arith.constant 0 : i32
    %c0_i32_0 = arith.constant 0 : i32
    %c0_i32_1 = arith.constant 0 : i32
    return %c0_i32, %c0_i32_0 : i32, i32
  }
  func.func @transform_4(%arg0: i32) -> (i32, i32) {
    %c0_i32 = arith.constant 0 : i32
    %c0_i32_0 = arith.constant 0 : i32
    %c0_i32_1 = arith.constant 0 : i32
    return %c0_i32, %c0_i32_0 : i32, i32
  }
  func.func @transform_5(%arg0: i32) -> (i32, i32) {
    %c0_i32 = arith.constant 0 : i32
    %c0_i32_0 = arith.constant 0 : i32
    %c0_i32_1 = arith.constant 0 : i32
    return %c0_i32, %c0_i32_0 : i32, i32
  }
  func.func @transform_6(%arg0: i32) -> (i32, i32) {
    %c0_i32 = arith.constant 0 : i32
    %c0_i32_0 = arith.constant 0 : i32
    %c0_i32_1 = arith.constant 0 : i32
    return %c0_i32, %c0_i32_0 : i32, i32
  }
  func.func @transform_7(%arg0: i32) -> (i32, i32) {
    %c0_i32 = arith.constant 0 : i32
    %c0_i32_0 = arith.constant 0 : i32
    %c0_i32_1 = arith.constant 0 : i32
    return %c0_i32, %c0_i32_0 : i32, i32
  }
  func.func @transform_8(%arg0: i32) -> (i32, i32) {
    %c0_i32 = arith.constant 0 : i32
    %c0_i32_0 = arith.constant 0 : i32
    %c0_i32_1 = arith.constant 0 : i32
    return %c0_i32, %c0_i32_0 : i32, i32
  }
  func.func @transform_9(%arg0: i32) -> (i32, i32) {
    %c0_i32 = arith.constant 0 : i32
    %c0_i32_0 = arith.constant 0 : i32
    %c0_i32_1 = arith.constant 0 : i32
    return %c0_i32, %c0_i32_0 : i32, i32
  }
  func.func @transform_10(%arg0: i32) -> (i32, i32) {
    %c0_i32 = arith.constant 0 : i32
    %c0_i32_0 = arith.constant 0 : i32
    %c0_i32_1 = arith.constant 0 : i32
    return %c0_i32, %c0_i32_0 : i32, i32
  }
  func.func @transform_11(%arg0: i32) -> (i32, i32) {
    %c0_i32 = arith.constant 0 : i32
    %c0_i32_0 = arith.constant 0 : i32
    %c0_i32_1 = arith.constant 0 : i32
    return %c0_i32, %c0_i32_0 : i32, i32
  }
  func.func @transform_12(%arg0: i32) -> (i32, i32) {
    %c0_i32 = arith.constant 0 : i32
    %c0_i32_0 = arith.constant 0 : i32
    %c0_i32_1 = arith.constant 0 : i32
    return %c0_i32, %c0_i32_0 : i32, i32
  }
  func.func @transform_13(%arg0: i32) -> (i32, i32) {
    %c0_i32 = arith.constant 0 : i32
    %c0_i32_0 = arith.constant 0 : i32
    %c0_i32_1 = arith.constant 0 : i32
    return %c0_i32, %c0_i32_0 : i32, i32
  }
  func.func @transform_14(%arg0: i32) -> (i32, i32) {
    %c0_i32 = arith.constant 0 : i32
    %c0_i32_0 = arith.constant 0 : i32
    %c0_i32_1 = arith.constant 0 : i32
    return %c0_i32, %c0_i32_0 : i32, i32
  }
  func.func @transform_15(%arg0: i32) -> (i32, i32) {
    %c0_i32 = arith.constant 0 : i32
    %c0_i32_0 = arith.constant 0 : i32
    return %arg0, %c0_i32 : i32, i32
  }
  func.func @transform_16(%arg0: i32) -> (i32, i32) {
    %c0_i32 = arith.constant 0 : i32
    %c0_i32_0 = arith.constant 0 : i32
    return %arg0, %c0_i32 : i32, i32
  }
}

</mosaic_0001>

<llo_original>
// kernel: autoencoder_forward.1
$region0: #{autoencoder_forward.1}
  #allocation0 [shape = 'u32[]', space=smem, size = 0x4, offset = 0x4, fixed_abs, tag = 'smem constant byte address 0x4 - core index']
  #allocation1 [shape = 'u32[144,128]{1,0:T(1,128)}', space=vmem, size = 0x12000, scoped, tag = 'internal scratch']
  %s0 = inlined_call_operand.vmem [shape: f32[64,784], index: 0, kind: input, shape index: {}]
  %s1 = inlined_call_operand.vmem [shape: s32[64,1], index: 1, kind: input, shape index: {}]
  %s2 = inlined_call_operand.vmem [shape: f32[784,128], index: 2, kind: input, shape index: {}]
  %s3 = inlined_call_operand.vmem [shape: f32[1,128], index: 3, kind: input, shape index: {}]
  %s4 = inlined_call_operand.vmem [shape: f32[128,64], index: 4, kind: input, shape index: {}]
  %s5 = inlined_call_operand.vmem [shape: f32[1,64], index: 5, kind: input, shape index: {}]
  %s6 = inlined_call_operand.vmem [shape: f32[64,32], index: 6, kind: input, shape index: {}]
  %s7 = inlined_call_operand.vmem [shape: f32[1,32], index: 7, kind: input, shape index: {}]
  %s8 = inlined_call_operand.vmem [shape: f32[32,64], index: 8, kind: input, shape index: {}]
  %s9 = inlined_call_operand.vmem [shape: f32[10,64], index: 9, kind: input, shape index: {}]
  %s10 = inlined_call_operand.vmem [shape: f32[1,64], index: 10, kind: input, shape index: {}]
  %s11 = inlined_call_operand.vmem [shape: f32[64,128], index: 11, kind: input, shape index: {}]
  %s12 = inlined_call_operand.vmem [shape: f32[1,128], index: 12, kind: input, shape index: {}]
  %s13 = inlined_call_operand.vmem [shape: f32[128,784], index: 13, kind: input, shape index: {}]
  %s14 = inlined_call_operand.vmem [shape: f32[1,784], index: 14, kind: input, shape index: {}]
  %s15 = inlined_call_operand.vmem [shape: f32[64,32], index: 15, kind: output, shape index: {0}]
  %s16 = inlined_call_operand.hbm [shape: f32[64,784], index: 16, kind: output, shape index: {1}]
  %17 = xla_tuple %s15, %s16
  %s18 = sld [smem:[#allocation0]]
  $region101: #{autoencoder_forward.1} parent=0
    _
  %s20 = ssub.s32 1, %s18
  %s21 = scalar_select 0, %s20, %s18
  $region1: #{autoencoder_forward.1} parent=0
    #allocation2 [shape = 'u8[229376]{0}', space=vmem, size = 0x38000, scoped, tag = 'output window, operand 1']
    #allocation3 [shape = 's32[2]{0}', space=sflag, size = 0x8, scoped, tag = 'scoped memory for autoencoder_forward.1']
    %22 = vsyncpa [#allocation3], 0
    %s23 = scalar_lea.sflag [#allocation3], 1
    %24 = vsyncpa %s23, 0
    loop: start=0, step=1, limit=4
    $region2: #{autoencoder_forward.1} parent=1 // loop_pre_header
      _
    $region3: #{autoencoder_forward.1} parent=1 // loop_header
      %s26 = sphi 0, %s30
      %p27 = scmp.ge.s32.totalorder %s26, 4
      %s36 = sphi 0, %s38
      %s39 = sphi 0, %s36
      %s40 = sphi 0, %s39
      %s56 = sphi 0, %s40
      %s62 = sphi 0, %s64
      %s65 = sphi 0, %s62
      %s66 = sphi 0, %s65
      %s82 = sphi 0, %s66
      %s86 = sphi 0, %s86
      %s88 = sphi 0, %s86
      %s89 = sphi 0, %s88
      %s103 = sphi 0, %s89
      %s107 = sphi 0, %s107
      %s109 = sphi 0, %s107
      %s110 = sphi 0, %s109
      %s124 = sphi 0, %s110
      %s128 = sphi 0, %s128
      %s130 = sphi 0, %s128
      %s131 = sphi 0, %s130
      %s145 = sphi 0, %s131
      %s149 = sphi 0, %s149
      %s151 = sphi 0, %s149
      %s152 = sphi 0, %s151
      %s166 = sphi 0, %s152
      %s170 = sphi 0, %s170
      %s172 = sphi 0, %s170
      %s173 = sphi 0, %s172
      %s187 = sphi 0, %s173
      %s191 = sphi 0, %s191
      %s193 = sphi 0, %s191
      %s194 = sphi 0, %s193
      %s208 = sphi 0, %s194
      %s212 = sphi 0, %s212
      %s214 = sphi 0, %s212
      %s215 = sphi 0, %s214
      %s229 = sphi 0, %s215
      %s233 = sphi 0, %s233
      %s235 = sphi 0, %s233
      %s236 = sphi 0, %s235
      %s250 = sphi 0, %s236
      %s254 = sphi 0, %s254
      %s256 = sphi 0, %s254
      %s257 = sphi 0, %s256
      %s271 = sphi 0, %s257
      %s275 = sphi 0, %s275
      %s277 = sphi 0, %s275
      %s278 = sphi 0, %s277
      %s292 = sphi 0, %s278
      %s296 = sphi 0, %s296
      %s298 = sphi 0, %s296
      %s299 = sphi 0, %s298
      %s313 = sphi 0, %s299
      %s317 = sphi 0, %s317
      %s319 = sphi 0, %s317
      %s320 = sphi 0, %s319
      %s334 = sphi 0, %s320
      %s338 = sphi 0, %s338
      %s340 = sphi 0, %s338
      %s341 = sphi 0, %s340
      %s355 = sphi 0, %s341
      %s361 = sphi 0, %s363
      %s364 = sphi 0, %s361
      %s365 = sphi 0, %s364
      %s381 = sphi 0, %s365
      %s387 = sphi 0, %s389
      %s390 = sphi 0, %s387
      %s391 = sphi 0, %s390
      %s407 = sphi 0, %s391
    $region4: #{autoencoder_forward.1} parent=1 // loop_header_branch
      %29 = sbr.rel (%p27) target = $region8
    $region5: #{autoencoder_forward.1} parent=1 // loop_body
      %s31 = ssub.s32 %s26, 1
      %s32 = ssub.s32 %s26, 2
      %s33 = sadd.s32 %s26, 1
      %s34 = ssub.s32 %s26, %s33
      %p35 = scmp.eq.s32.totalorder %s34, 0
      %s37 = sadd.s32 %s36, 1
      %s38 = scalar_select %p35, %s36, %s37
      %p41 = pneg %p35
      %p42 = scmp.eq.s32.totalorder %s26, 1
      %p43 = por %p41, %p42
      %p44 = scmp.ne.s32.totalorder %s36, %s39
      %p45 = scmp.eq.s32.totalorder %s26, 0
      %p46 = por %p44, %p45
      %p47 = scmp.ne.s32.totalorder %s36, %s39
      %p48 = scmp.eq.s32.totalorder %s31, 1
      %p49 = por %p47, %p48
      %p50 = scmp.ne.s32.totalorder %s39, %s40
      %p51 = scmp.eq.s32.totalorder %s31, 0
      %p52 = por %p50, %p51
      %p53 = scmp.ne.s32.totalorder %s39, %s40
      %p54 = scmp.eq.s32.totalorder %s32, 1
      %p55 = por %p53, %p54
      %p57 = scmp.ne.s32.totalorder %s40, %s56
      %p58 = scmp.eq.s32.totalorder %s32, 0
      %p59 = por %p57, %p58
      %s60 = ssub.s32 %s26, %s33
      %p61 = scmp.eq.s32.totalorder %s60, 0
      %s63 = sadd.s32 %s62, 1
      %s64 = scalar_select %p61, %s62, %s63
      %p67 = pneg %p61
      %p68 = scmp.eq.s32.totalorder %s26, 1
      %p69 = por %p67, %p68
      %p70 = scmp.ne.s32.totalorder %s62, %s65
      %p71 = scmp.eq.s32.totalorder %s26, 0
      %p72 = por %p70, %p71
      %p73 = scmp.ne.s32.totalorder %s62, %s65
      %p74 = scmp.eq.s32.totalorder %s31, 1
      %p75 = por %p73, %p74
      %p76 = scmp.ne.s32.totalorder %s65, %s66
      %p77 = scmp.eq.s32.totalorder %s31, 0
      %p78 = por %p76, %p77
      %p79 = scmp.ne.s32.totalorder %s65, %s66
      %p80 = scmp.eq.s32.totalorder %s32, 1
      %p81 = por %p79, %p80
      %p83 = scmp.ne.s32.totalorder %s66, %s82
      %p84 = scmp.eq.s32.totalorder %s32, 0
      %p85 = por %p83, %p84
      %s87 = sadd.s32 %s86, 1
      %p90 = scmp.eq.s32.totalorder %s26, 1
      %p91 = scmp.ne.s32.totalorder %s86, %s88
      %p92 = scmp.eq.s32.totalorder %s26, 0
      %p93 = por %p91, %p92
      %p94 = scmp.ne.s32.totalorder %s86, %s88
      %p95 = scmp.eq.s32.totalorder %s31, 1
      %p96 = por %p94, %p95
      %p97 = scmp.ne.s32.totalorder %s88, %s89
      %p98 = scmp.eq.s32.totalorder %s31, 0
      %p99 = por %p97, %p98
      %p100 = scmp.ne.s32.totalorder %s88, %s89
      %p101 = scmp.eq.s32.totalorder %s32, 1
      %p102 = por %p100, %p101
      %p104 = scmp.ne.s32.totalorder %s89, %s103
      %p105 = scmp.eq.s32.totalorder %s32, 0
      %p106 = por %p104, %p105
      %s108 = sadd.s32 %s107, 1
      %p111 = scmp.eq.s32.totalorder %s26, 1
      %p112 = scmp.ne.s32.totalorder %s107, %s109
      %p113 = scmp.eq.s32.totalorder %s26, 0
      %p114 = por %p112, %p113
      %p115 = scmp.ne.s32.totalorder %s107, %s109
      %p116 = scmp.eq.s32.totalorder %s31, 1
      %p117 = por %p115, %p116
      %p118 = scmp.ne.s32.totalorder %s109, %s110
      %p119 = scmp.eq.s32.totalorder %s31, 0
      %p120 = por %p118, %p119
      %p121 = scmp.ne.s32.totalorder %s109, %s110
      %p122 = scmp.eq.s32.totalorder %s32, 1
      %p123 = por %p121, %p122
      %p125 = scmp.ne.s32.totalorder %s110, %s124
      %p126 = scmp.eq.s32.totalorder %s32, 0
      %p127 = por %p125, %p126
      %s129 = sadd.s32 %s128, 1
      %p132 = scmp.eq.s32.totalorder %s26, 1
      %p133 = scmp.ne.s32.totalorder %s128, %s130
      %p134 = scmp.eq.s32.totalorder %s26, 0
      %p135 = por %p133, %p134
      %p136 = scmp.ne.s32.totalorder %s128, %s130
      %p137 = scmp.eq.s32.totalorder %s31, 1
      %p138 = por %p136, %p137
      %p139 = scmp.ne.s32.totalorder %s130, %s131
      %p140 = scmp.eq.s32.totalorder %s31, 0
      %p141 = por %p139, %p140
      %p142 = scmp.ne.s32.totalorder %s130, %s131
      %p143 = scmp.eq.s32.totalorder %s32, 1
      %p144 = por %p142, %p143
      %p146 = scmp.ne.s32.totalorder %s131, %s145
      %p147 = scmp.eq.s32.totalorder %s32, 0
      %p148 = por %p146, %p147
      %s150 = sadd.s32 %s149, 1
      %p153 = scmp.eq.s32.totalorder %s26, 1
      %p154 = scmp.ne.s32.totalorder %s149, %s151
      %p155 = scmp.eq.s32.totalorder %s26, 0
      %p156 = por %p154, %p155
      %p157 = scmp.ne.s32.totalorder %s149, %s151
      %p158 = scmp.eq.s32.totalorder %s31, 1
      %p159 = por %p157, %p158
      %p160 = scmp.ne.s32.totalorder %s151, %s152
      %p161 = scmp.eq.s32.totalorder %s31, 0
      %p162 = por %p160, %p161
      %p163 = scmp.ne.s32.totalorder %s151, %s152
      %p164 = scmp.eq.s32.totalorder %s32, 1
      %p165 = por %p163, %p164
      %p167 = scmp.ne.s32.totalorder %s152, %s166
      %p168 = scmp.eq.s32.totalorder %s32, 0
      %p169 = por %p167, %p168
      %s171 = sadd.s32 %s170, 1
      %p174 = scmp.eq.s32.totalorder %s26, 1
      %p175 = scmp.ne.s32.totalorder %s170, %s172
      %p176 = scmp.eq.s32.totalorder %s26, 0
      %p177 = por %p175, %p176
      %p178 = scmp.ne.s32.totalorder %s170, %s172
      %p179 = scmp.eq.s32.totalorder %s31, 1
      %p180 = por %p178, %p179
      %p181 = scmp.ne.s32.totalorder %s172, %s173
      %p182 = scmp.eq.s32.totalorder %s31, 0
      %p183 = por %p181, %p182
      %p184 = scmp.ne.s32.totalorder %s172, %s173
      %p185 = scmp.eq.s32.totalorder %s32, 1
      %p186 = por %p184, %p185
      %p188 = scmp.ne.s32.totalorder %s173, %s187
      %p189 = scmp.eq.s32.totalorder %s32, 0
      %p190 = por %p188, %p189
      %s192 = sadd.s32 %s191, 1
      %p195 = scmp.eq.s32.totalorder %s26, 1
      %p196 = scmp.ne.s32.totalorder %s191, %s193
      %p197 = scmp.eq.s32.totalorder %s26, 0
      %p198 = por %p196, %p197
      %p199 = scmp.ne.s32.totalorder %s191, %s193
      %p200 = scmp.eq.s32.totalorder %s31, 1
      %p201 = por %p199, %p200
      %p202 = scmp.ne.s32.totalorder %s193, %s194
      %p203 = scmp.eq.s32.totalorder %s31, 0
      %p204 = por %p202, %p203
      %p205 = scmp.ne.s32.totalorder %s193, %s194
      %p206 = scmp.eq.s32.totalorder %s32, 1
      %p207 = por %p205, %p206
      %p209 = scmp.ne.s32.totalorder %s194, %s208
      %p210 = scmp.eq.s32.totalorder %s32, 0
      %p211 = por %p209, %p210
      %s213 = sadd.s32 %s212, 1
      %p216 = scmp.eq.s32.totalorder %s26, 1
      %p217 = scmp.ne.s32.totalorder %s212, %s214
      %p218 = scmp.eq.s32.totalorder %s26, 0
      %p219 = por %p217, %p218
      %p220 = scmp.ne.s32.totalorder %s212, %s214
      %p221 = scmp.eq.s32.totalorder %s31, 1
      %p222 = por %p220, %p221
      %p223 = scmp.ne.s32.totalorder %s214, %s215
      %p224 = scmp.eq.s32.totalorder %s31, 0
      %p225 = por %p223, %p224
      %p226 = scmp.ne.s32.totalorder %s214, %s215
      %p227 = scmp.eq.s32.totalorder %s32, 1
      %p228 = por %p226, %p227
      %p230 = scmp.ne.s32.totalorder %s215, %s229
      %p231 = scmp.eq.s32.totalorder %s32, 0
      %p232 = por %p230, %p231
      %s234 = sadd.s32 %s233, 1
      %p237 = scmp.eq.s32.totalorder %s26, 1
      %p238 = scmp.ne.s32.totalorder %s233, %s235
      %p239 = scmp.eq.s32.totalorder %s26, 0
      %p240 = por %p238, %p239
      %p241 = scmp.ne.s32.totalorder %s233, %s235
      %p242 = scmp.eq.s32.totalorder %s31, 1
      %p243 = por %p241, %p242
      %p244 = scmp.ne.s32.totalorder %s235, %s236
      %p245 = scmp.eq.s32.totalorder %s31, 0
      %p246 = por %p244, %p245
      %p247 = scmp.ne.s32.totalorder %s235, %s236
      %p248 = scmp.eq.s32.totalorder %s32, 1
      %p249 = por %p247, %p248
      %p251 = scmp.ne.s32.totalorder %s236, %s250
      %p252 = scmp.eq.s32.totalorder %s32, 0
      %p253 = por %p251, %p252
      %s255 = sadd.s32 %s254, 1
      %p258 = scmp.eq.s32.totalorder %s26, 1
      %p259 = scmp.ne.s32.totalorder %s254, %s256
      %p260 = scmp.eq.s32.totalorder %s26, 0
      %p261 = por %p259, %p260
      %p262 = scmp.ne.s32.totalorder %s254, %s256
      %p263 = scmp.eq.s32.totalorder %s31, 1
      %p264 = por %p262, %p263
      %p265 = scmp.ne.s32.totalorder %s256, %s257
      %p266 = scmp.eq.s32.totalorder %s31, 0
      %p267 = por %p265, %p266
      %p268 = scmp.ne.s32.totalorder %s256, %s257
      %p269 = scmp.eq.s32.totalorder %s32, 1
      %p270 = por %p268, %p269
      %p272 = scmp.ne.s32.totalorder %s257, %s271
      %p273 = scmp.eq.s32.totalorder %s32, 0
      %p274 = por %p272, %p273
      %s276 = sadd.s32 %s275, 1
      %p279 = scmp.eq.s32.totalorder %s26, 1
      %p280 = scmp.ne.s32.totalorder %s275, %s277
      %p281 = scmp.eq.s32.totalorder %s26, 0
      %p282 = por %p280, %p281
      %p283 = scmp.ne.s32.totalorder %s275, %s277
      %p284 = scmp.eq.s32.totalorder %s31, 1
      %p285 = por %p283, %p284
      %p286 = scmp.ne.s32.totalorder %s277, %s278
      %p287 = scmp.eq.s32.totalorder %s31, 0
      %p288 = por %p286, %p287
      %p289 = scmp.ne.s32.totalorder %s277, %s278
      %p290 = scmp.eq.s32.totalorder %s32, 1
      %p291 = por %p289, %p290
      %p293 = scmp.ne.s32.totalorder %s278, %s292
      %p294 = scmp.eq.s32.totalorder %s32, 0
      %p295 = por %p293, %p294
      %s297 = sadd.s32 %s296, 1
      %p300 = scmp.eq.s32.totalorder %s26, 1
      %p301 = scmp.ne.s32.totalorder %s296, %s298
      %p302 = scmp.eq.s32.totalorder %s26, 0
      %p303 = por %p301, %p302
      %p304 = scmp.ne.s32.totalorder %s296, %s298
      %p305 = scmp.eq.s32.totalorder %s31, 1
      %p306 = por %p304, %p305
      %p307 = scmp.ne.s32.totalorder %s298, %s299
      %p308 = scmp.eq.s32.totalorder %s31, 0
      %p309 = por %p307, %p308
      %p310 = scmp.ne.s32.totalorder %s298, %s299
      %p311 = scmp.eq.s32.totalorder %s32, 1
      %p312 = por %p310, %p311
      %p314 = scmp.ne.s32.totalorder %s299, %s313
      %p315 = scmp.eq.s32.totalorder %s32, 0
      %p316 = por %p314, %p315
      %s318 = sadd.s32 %s317, 1
      %p321 = scmp.eq.s32.totalorder %s26, 1
      %p322 = scmp.ne.s32.totalorder %s317, %s319
      %p323 = scmp.eq.s32.totalorder %s26, 0
      %p324 = por %p322, %p323
      %p325 = scmp.ne.s32.totalorder %s317, %s319
      %p326 = scmp.eq.s32.totalorder %s31, 1
      %p327 = por %p325, %p326
      %p328 = scmp.ne.s32.totalorder %s319, %s320
      %p329 = scmp.eq.s32.totalorder %s31, 0
      %p330 = por %p328, %p329
      %p331 = scmp.ne.s32.totalorder %s319, %s320
      %p332 = scmp.eq.s32.totalorder %s32, 1
      %p333 = por %p331, %p332
      %p335 = scmp.ne.s32.totalorder %s320, %s334
      %p336 = scmp.eq.s32.totalorder %s32, 0
      %p337 = por %p335, %p336
      %s339 = sadd.s32 %s338, 1
      %p342 = scmp.eq.s32.totalorder %s26, 1
      %p343 = scmp.ne.s32.totalorder %s338, %s340
      %p344 = scmp.eq.s32.totalorder %s26, 0
      %p345 = por %p343, %p344
      %p346 = scmp.ne.s32.totalorder %s338, %s340
      %p347 = scmp.eq.s32.totalorder %s31, 1
      %p348 = por %p346, %p347
      %p349 = scmp.ne.s32.totalorder %s340, %s341
      %p350 = scmp.eq.s32.totalorder %s31, 0
      %p351 = por %p349, %p350
      %p352 = scmp.ne.s32.totalorder %s340, %s341
      %p353 = scmp.eq.s32.totalorder %s32, 1
      %p354 = por %p352, %p353
      %p356 = scmp.ne.s32.totalorder %s341, %s355
      %p357 = scmp.eq.s32.totalorder %s32, 0
      %p358 = por %p356, %p357
      %s359 = ssub.s32 %s26, %s33
      %p360 = scmp.eq.s32.totalorder %s359, 0
      %s362 = sadd.s32 %s361, 1
      %s363 = scalar_select %p360, %s361, %s362
      %p366 = pneg %p360
      %p367 = scmp.eq.s32.totalorder %s26, 1
      %p368 = por %p366, %p367
      %p369 = scmp.ne.s32.totalorder %s361, %s364
      %p370 = scmp.eq.s32.totalorder %s26, 0
      %p371 = por %p369, %p370
      %p372 = scmp.ne.s32.totalorder %s361, %s364
      %p373 = scmp.eq.s32.totalorder %s31, 1
      %p374 = por %p372, %p373
      %p375 = scmp.ne.s32.totalorder %s364, %s365
      %p376 = scmp.eq.s32.totalorder %s31, 0
      %p377 = por %p375, %p376
      %p378 = scmp.ne.s32.totalorder %s364, %s365
      %p379 = scmp.eq.s32.totalorder %s32, 1
      %p380 = por %p378, %p379
      %p382 = scmp.ne.s32.totalorder %s365, %s381
      %p383 = scmp.eq.s32.totalorder %s32, 0
      %p384 = por %p382, %p383
      %s385 = ssub.s32 %s26, %s33
      %p386 = scmp.eq.s32.totalorder %s385, 0
      %s388 = sadd.s32 %s387, 1
      %s389 = scalar_select %p386, %s387, %s388
      %p392 = pneg %p386
      %p393 = scmp.eq.s32.totalorder %s26, 1
      %p394 = por %p392, %p393
      %p395 = scmp.ne.s32.totalorder %s387, %s390
      %p396 = scmp.eq.s32.totalorder %s26, 0
      %p397 = por %p395, %p396
      %p398 = scmp.ne.s32.totalorder %s387, %s390
      %p399 = scmp.eq.s32.totalorder %s31, 1
      %p400 = por %p398, %p399
      %p401 = scmp.ne.s32.totalorder %s390, %s391
      %p402 = scmp.eq.s32.totalorder %s31, 0
      %p403 = por %p401, %p402
      %p404 = scmp.ne.s32.totalorder %s390, %s391
      %p405 = scmp.eq.s32.totalorder %s32, 1
      %p406 = por %p404, %p405
      %p408 = scmp.ne.s32.totalorder %s391, %s407
      %p409 = scmp.eq.s32.totalorder %s32, 0
      %p410 = por %p408, %p409
      %p411 = scmp.le.s32.totalorder 1, %s26
      %p412 = scmp.lt.s32.totalorder %s26, 3
      %p413 = pnand %p411, %p412
      %p414 = pneg %p413
      // Predicated region
      $region9: #{autoencoder_forward.1} parent=5 // pred_check
        _
      $region10: #{autoencoder_forward.1} parent=5 // pred_check_branch
        %416 = sbr.rel (%p413) target = $region12
      $region11: #{autoencoder_forward.1} parent=5 // pred_region
        %s417 = ssub.s32 %s26, 1
        // Predicated region
        $region13: #{autoencoder_forward.1} parent=11 // pred_check
          %p418 = pneg %p99
        $region14: #{autoencoder_forward.1} parent=11 // pred_check_branch
          %420 = sbr.rel (%p418) target = $region16
        $region15: #{autoencoder_forward.1} parent=11 // pred_region
          _
        $region16: #{autoencoder_forward.1} parent=11 // pred_fallthru
          _
        // Predicated region
        $region17: #{autoencoder_forward.1} parent=11 // pred_check
          %p421 = pneg %p120
        $region18: #{autoencoder_forward.1} parent=11 // pred_check_branch
          %423 = sbr.rel (%p421) target = $region20
        $region19: #{autoencoder_forward.1} parent=11 // pred_region
          _
        $region20: #{autoencoder_forward.1} parent=11 // pred_fallthru
          _
        // Predicated region
        $region21: #{autoencoder_forward.1} parent=11 // pred_check
          %p424 = pneg %p141
        $region22: #{autoencoder_forward.1} parent=11 // pred_check_branch
          %426 = sbr.rel (%p424) target = $region24
        $region23: #{autoencoder_forward.1} parent=11 // pred_region
          _
        $region24: #{autoencoder_forward.1} parent=11 // pred_fallthru
          _
        // Predicated region
        $region25: #{autoencoder_forward.1} parent=11 // pred_check
          %p427 = pneg %p162
        $region26: #{autoencoder_forward.1} parent=11 // pred_check_branch
          %429 = sbr.rel (%p427) target = $region28
        $region27: #{autoencoder_forward.1} parent=11 // pred_region
          _
        $region28: #{autoencoder_forward.1} parent=11 // pred_fallthru
          _
        // Predicated region
        $region29: #{autoencoder_forward.1} parent=11 // pred_check
          %p430 = pneg %p183
        $region30: #{autoencoder_forward.1} parent=11 // pred_check_branch
          %432 = sbr.rel (%p430) target = $region32
        $region31: #{autoencoder_forward.1} parent=11 // pred_region
          _
        $region32: #{autoencoder_forward.1} parent=11 // pred_fallthru
          _
        // Predicated region
        $region33: #{autoencoder_forward.1} parent=11 // pred_check
          %p433 = pneg %p204
        $region34: #{autoencoder_forward.1} parent=11 // pred_check_branch
          %435 = sbr.rel (%p433) target = $region36
        $region35: #{autoencoder_forward.1} parent=11 // pred_region
          _
        $region36: #{autoencoder_forward.1} parent=11 // pred_fallthru
          _
        // Predicated region
        $region37: #{autoencoder_forward.1} parent=11 // pred_check
          %p436 = pneg %p225
        $region38: #{autoencoder_forward.1} parent=11 // pred_check_branch
          %438 = sbr.rel (%p436) target = $region40
        $region39: #{autoencoder_forward.1} parent=11 // pred_region
          _
        $region40: #{autoencoder_forward.1} parent=11 // pred_fallthru
          _
        // Predicated region
        $region41: #{autoencoder_forward.1} parent=11 // pred_check
          %p439 = pneg %p246
        $region42: #{autoencoder_forward.1} parent=11 // pred_check_branch
          %441 = sbr.rel (%p439) target = $region44
        $region43: #{autoencoder_forward.1} parent=11 // pred_region
          _
        $region44: #{autoencoder_forward.1} parent=11 // pred_fallthru
          _
        // Predicated region
        $region45: #{autoencoder_forward.1} parent=11 // pred_check
          %p442 = pneg %p267
        $region46: #{autoencoder_forward.1} parent=11 // pred_check_branch
          %444 = sbr.rel (%p442) target = $region48
        $region47: #{autoencoder_forward.1} parent=11 // pred_region
          _
        $region48: #{autoencoder_forward.1} parent=11 // pred_fallthru
          _
        // Predicated region
        $region49: #{autoencoder_forward.1} parent=11 // pred_check
          %p445 = pneg %p288
        $region50: #{autoencoder_forward.1} parent=11 // pred_check_branch
          %447 = sbr.rel (%p445) target = $region52
        $region51: #{autoencoder_forward.1} parent=11 // pred_region
          _
        $region52: #{autoencoder_forward.1} parent=11 // pred_fallthru
          _
        // Predicated region
        $region53: #{autoencoder_forward.1} parent=11 // pred_check
          %p448 = pneg %p309
        $region54: #{autoencoder_forward.1} parent=11 // pred_check_branch
          %450 = sbr.rel (%p448) target = $region56
        $region55: #{autoencoder_forward.1} parent=11 // pred_region
          _
        $region56: #{autoencoder_forward.1} parent=11 // pred_fallthru
          _
        // Predicated region
        $region57: #{autoencoder_forward.1} parent=11 // pred_check
          %p451 = pneg %p330
        $region58: #{autoencoder_forward.1} parent=11 // pred_check_branch
          %453 = sbr.rel (%p451) target = $region60
        $region59: #{autoencoder_forward.1} parent=11 // pred_region
          _
        $region60: #{autoencoder_forward.1} parent=11 // pred_fallthru
          _
        // Predicated region
        $region61: #{autoencoder_forward.1} parent=11 // pred_check
          %p454 = pneg %p351
        $region62: #{autoencoder_forward.1} parent=11 // pred_check_branch
          %456 = sbr.rel (%p454) target = $region64
        $region63: #{autoencoder_forward.1} parent=11 // pred_region
          _
        $region64: #{autoencoder_forward.1} parent=11 // pred_fallthru
          _
      $region12: #{autoencoder_forward.1} parent=5 // pred_fallthru
        _
      %p457 = scmp.lt.s32.totalorder %s26, 2
      // Predicated region
      $region65: #{autoencoder_forward.1} parent=5 // pred_check
        %p458 = pneg %p457
      $region66: #{autoencoder_forward.1} parent=5 // pred_check_branch
        %460 = sbr.rel (%p458) target = $region68
      $region67: #{autoencoder_forward.1} parent=5 // pred_region
        // Predicated region
        $region69: #{autoencoder_forward.1} parent=67 // pred_check
          %p461 = pneg %p46
        $region70: #{autoencoder_forward.1} parent=67 // pred_check_branch
          %463 = sbr.rel (%p461) target = $region72
        $region71: #{autoencoder_forward.1} parent=67 // pred_region
          %s464 = smul.u32 4, %s26
          %p465 = scmp.lt.s32.totalorder %s464, 7
          %s466 = scalar_select %p465, %s464, 7
          %s467 = smul.addr %s466, 7
          %s468 = smul.addr %s467, 8
          %s469 = scalar_lea.vmem %s0, %s468
          %s470 = smul.u32 4, %s26
        $region72: #{autoencoder_forward.1} parent=67 // pred_fallthru
          _
        // Predicated region
        $region73: #{autoencoder_forward.1} parent=67 // pred_check
          %p471 = pneg %p72
        $region74: #{autoencoder_forward.1} parent=67 // pred_check_branch
          %473 = sbr.rel (%p471) target = $region76
        $region75: #{autoencoder_forward.1} parent=67 // pred_region
          %s474 = smul.u32 4, %s26
          %p475 = scmp.lt.s32.totalorder %s474, 7
          %s476 = scalar_select %p475, %s474, 7
          %s477 = smul.addr %s476, 8
          %s478 = scalar_lea.vmem %s1, %s477
          %s479 = smul.u32 4, %s26
        $region76: #{autoencoder_forward.1} parent=67 // pred_fallthru
          _
      $region68: #{autoencoder_forward.1} parent=5 // pred_fallthru
        _
      %p480 = scmp.le.s32.totalorder 1, %s26
      %p481 = scmp.lt.s32.totalorder %s26, 3
      %p482 = pnand %p480, %p481
      %p483 = pneg %p482
      // Predicated region
      $region77: #{autoencoder_forward.1} parent=5 // pred_check
        _
      $region78: #{autoencoder_forward.1} parent=5 // pred_check_branch
        %485 = sbr.rel (%p482) target = $region80
      $region79: #{autoencoder_forward.1} parent=5 // pred_region
        %s486 = ssub.s32 %s26, 1
        %s487 = smul.u32 4, %s31
        %p488 = scmp.lt.s32.totalorder %s487, 7
        %s489 = scalar_select %p488, %s487, 7
        %s490 = smul.addr %s489, 7
        %s491 = smul.addr %s490, 8
        %s492 = scalar_lea.vmem %s0, %s491
        %p493 = pneg %p52
        %p494 = pneg %p49
        %s495 = smul.u32 4, %s31
        %p496 = scmp.lt.s32.totalorder %s495, 7
        %s497 = scalar_select %p496, %s495, 7
        %s498 = smul.addr %s497, 8
        %s499 = scalar_lea.vmem %s1, %s498
        %p500 = pneg %p78
        %p501 = pneg %p75
        %p502 = pneg %p99
        %p503 = pneg %p96
        %p504 = pneg %p120
        %p505 = pneg %p117
        %p506 = pneg %p141
        %p507 = pneg %p138
        %p508 = pneg %p162
        %p509 = pneg %p159
        %p510 = pneg %p183
        %p511 = pneg %p180
        %p512 = pneg %p204
        %p513 = pneg %p201
        %p514 = pneg %p225
        %p515 = pneg %p222
        %p516 = pneg %p246
        %p517 = pneg %p243
        %p518 = pneg %p267
        %p519 = pneg %p264
        %p520 = pneg %p288
        %p521 = pneg %p285
        %p522 = pneg %p309
        %p523 = pneg %p306
        %p524 = pneg %p330
        %p525 = pneg %p327
        %p526 = pneg %p351
        %p527 = pneg %p348
        %p528 = pneg %p377
        %p529 = pneg %p374
        %s530 = smul.u32 4, %s31
        %p531 = scmp.lt.s32.totalorder %s530, 7
        %s532 = scalar_select %p531, %s530, 7
        %s533 = smul.addr %s532, 8
        %s534 = scalar_lea.vmem %s15, %s533
        %p535 = pneg %p403
        %p536 = pneg %p400
        %s537 = sand.u32 %s390, 1
        %s538 = scalar_lea.sflag [#allocation3], %s537
        %s539 = sand.u32 %s390, 1
        %s540 = smul.addr %s539, 224
        %s541 = scalar_lea.vmem [#allocation2], %s540
        %s542 = smul.u32 4, %s31
        %p543 = scmp.lt.s32.totalorder %s542, 7
        %s544 = scalar_select %p543, %s542, 7
        %s545 = smul.addr %s544, 7
        %s546 = smul.addr %s545, 8
        %s547 = scalar_lea.vmem %s0, %s546
        %s548 = smul.u32 4, %s31
        %s549 = smul.u32 4, %s31
        %p550 = scmp.lt.s32.totalorder %s549, 7
        %s551 = scalar_select %p550, %s549, 7
        %s552 = smul.addr %s551, 8
        %s553 = scalar_lea.vmem %s1, %s552
        %s554 = smul.u32 4, %s31
        %s555 = smul.u32 4, %s31
        %p556 = scmp.lt.s32.totalorder %s555, 7
        %s557 = scalar_select %p556, %s555, 7
        %s558 = smul.addr %s557, 8
        %s559 = scalar_lea.vmem %s15, %s558
        %s560 = smul.u32 4, %s31
        %s561 = smul.u32 4, %s31
        %v562 = vld [vmem:[%s547] sm:$0xff]
        %v563 = vld [vmem:[%s547 + $0x8] sm:$0xff]
        %v564 = vld [vmem:[%s547 + $0x10] sm:$0xff]
        %v565 = vld [vmem:[%s547 + $0x18] sm:$0xff]
        %v566 = vld [vmem:[%s547 + $0x20] sm:$0xff]
        %v567 = vld [vmem:[%s547 + $0x28] sm:$0xff]
        %v568 = vld [vmem:[%s547 + $0x30] sm:$0xff]
        %v569 = vld [vmem:[%s547 + $0x38] sm:$0xff]
        %v570 = vld [vmem:[%s547 + $0x40] sm:$0xff]
        %v571 = vld [vmem:[%s547 + $0x48] sm:$0xff]
        %v572 = vld [vmem:[%s547 + $0x50] sm:$0xff]
        %v573 = vld [vmem:[%s547 + $0x58] sm:$0xff]
        %v574 = vld [vmem:[%s547 + $0x60] sm:$0xff]
        %v575 = vld [vmem:[%s547 + $0x68] sm:$0xff]
        %v576 = vld [vmem:[%s547 + $0x70] sm:$0xff]
        %v577 = vld [vmem:[%s547 + $0x78] sm:$0xff]
        %v578 = vld [vmem:[%s547 + $0x80] sm:$0xff]
        %v579 = vld [vmem:[%s547 + $0x88] sm:$0xff]
        %v580 = vld [vmem:[%s547 + $0x90] sm:$0xff]
        %v581 = vld [vmem:[%s547 + $0x98] sm:$0xff]
        %v582 = vld [vmem:[%s547 + $0xa0] sm:$0xff]
        %v583 = vld [vmem:[%s547 + $0xa8] sm:$0xff]
        %v584 = vld [vmem:[%s547 + $0xb0] sm:$0xff]
        %v585 = vld [vmem:[%s547 + $0xb8] sm:$0xff]
        %v586 = vld [vmem:[%s547 + $0xc0] sm:$0xff]
        %v587 = vld [vmem:[%s547 + $0xc8] sm:$0xff]
        %v588 = vld [vmem:[%s547 + $0xd0] sm:$0xff]
        %v589 = vld [vmem:[%s547 + $0xd8] sm:$0xff]
        %v590 = vld [vmem:[%s2] sm:$0xff]
        %v591 = vld [vmem:[%s2 + $0x8] sm:$0xff]
        %v592 = vld [vmem:[%s2 + $0x10] sm:$0xff]
        %v593 = vld [vmem:[%s2 + $0x18] sm:$0xff]
        %v594 = vld [vmem:[%s2 + $0x20] sm:$0xff]
        %v595 = vld [vmem:[%s2 + $0x28] sm:$0xff]
        %v596 = vld [vmem:[%s2 + $0x30] sm:$0xff]
        %v597 = vld [vmem:[%s2 + $0x38] sm:$0xff]
        %v598 = vld [vmem:[%s2 + $0x40] sm:$0xff]
        %v599 = vld [vmem:[%s2 + $0x48] sm:$0xff]
        %v600 = vld [vmem:[%s2 + $0x50] sm:$0xff]
        %v601 = vld [vmem:[%s2 + $0x58] sm:$0xff]
        %v602 = vld [vmem:[%s2 + $0x60] sm:$0xff]
        %v603 = vld [vmem:[%s2 + $0x68] sm:$0xff]
        %v604 = vld [vmem:[%s2 + $0x70] sm:$0xff]
        %v605 = vld [vmem:[%s2 + $0x78] sm:$0xff]
        %v606 = vld [vmem:[%s2 + $0x80] sm:$0xff]
        %v607 = vld [vmem:[%s2 + $0x88] sm:$0xff]
        %v608 = vld [vmem:[%s2 + $0x90] sm:$0xff]
        %v609 = vld [vmem:[%s2 + $0x98] sm:$0xff]
        %v610 = vld [vmem:[%s2 + $0xa0] sm:$0xff]
        %v611 = vld [vmem:[%s2 + $0xa8] sm:$0xff]
        %v612 = vld [vmem:[%s2 + $0xb0] sm:$0xff]
        %v613 = vld [vmem:[%s2 + $0xb8] sm:$0xff]
        %v614 = vld [vmem:[%s2 + $0xc0] sm:$0xff]
        %v615 = vld [vmem:[%s2 + $0xc8] sm:$0xff]
        %v616 = vld [vmem:[%s2 + $0xd0] sm:$0xff]
        %v617 = vld [vmem:[%s2 + $0xd8] sm:$0xff]
        %v618 = vld [vmem:[%s2 + $0xe0] sm:$0xff]
        %v619 = vld [vmem:[%s2 + $0xe8] sm:$0xff]
        %v620 = vld [vmem:[%s2 + $0xf0] sm:$0xff]
        %v621 = vld [vmem:[%s2 + $0xf8] sm:$0xff]
        %v622 = vld [vmem:[%s2 + $0x100] sm:$0xff]
        %v623 = vld [vmem:[%s2 + $0x108] sm:$0xff]
        %v624 = vld [vmem:[%s2 + $0x110] sm:$0xff]
        %v625 = vld [vmem:[%s2 + $0x118] sm:$0xff]
        %v626 = vld [vmem:[%s2 + $0x120] sm:$0xff]
        %v627 = vld [vmem:[%s2 + $0x128] sm:$0xff]
        %v628 = vld [vmem:[%s2 + $0x130] sm:$0xff]
        %v629 = vld [vmem:[%s2 + $0x138] sm:$0xff]
        %v630 = vld [vmem:[%s2 + $0x140] sm:$0xff]
        %v631 = vld [vmem:[%s2 + $0x148] sm:$0xff]
        %v632 = vld [vmem:[%s2 + $0x150] sm:$0xff]
        %v633 = vld [vmem:[%s2 + $0x158] sm:$0xff]
        %v634 = vld [vmem:[%s2 + $0x160] sm:$0xff]
        %v635 = vld [vmem:[%s2 + $0x168] sm:$0xff]
        %v636 = vld [vmem:[%s2 + $0x170] sm:$0xff]
        %v637 = vld [vmem:[%s2 + $0x178] sm:$0xff]
        %v638 = vld [vmem:[%s2 + $0x180] sm:$0xff]
        %v639 = vld [vmem:[%s2 + $0x188] sm:$0xff]
        %v640 = vld [vmem:[%s2 + $0x190] sm:$0xff]
        %v641 = vld [vmem:[%s2 + $0x198] sm:$0xff]
        %v642 = vld [vmem:[%s2 + $0x1a0] sm:$0xff]
        %v643 = vld [vmem:[%s2 + $0x1a8] sm:$0xff]
        %v644 = vld [vmem:[%s2 + $0x1b0] sm:$0xff]
        %v645 = vld [vmem:[%s2 + $0x1b8] sm:$0xff]
        %v646 = vld [vmem:[%s2 + $0x1c0] sm:$0xff]
        %v647 = vld [vmem:[%s2 + $0x1c8] sm:$0xff]
        %v648 = vld [vmem:[%s2 + $0x1d0] sm:$0xff]
        %v649 = vld [vmem:[%s2 + $0x1d8] sm:$0xff]
        %v650 = vld [vmem:[%s2 + $0x1e0] sm:$0xff]
        %v651 = vld [vmem:[%s2 + $0x1e8] sm:$0xff]
        %v652 = vld [vmem:[%s2 + $0x1f0] sm:$0xff]
        %v653 = vld [vmem:[%s2 + $0x1f8] sm:$0xff]
        %v654 = vld [vmem:[%s2 + $0x200] sm:$0xff]
        %v655 = vld [vmem:[%s2 + $0x208] sm:$0xff]
        %v656 = vld [vmem:[%s2 + $0x210] sm:$0xff]
        %v657 = vld [vmem:[%s2 + $0x218] sm:$0xff]
        %v658 = vld [vmem:[%s2 + $0x220] sm:$0xff]
        %v659 = vld [vmem:[%s2 + $0x228] sm:$0xff]
        %v660 = vld [vmem:[%s2 + $0x230] sm:$0xff]
        %v661 = vld [vmem:[%s2 + $0x238] sm:$0xff]
        %v662 = vld [vmem:[%s2 + $0x240] sm:$0xff]
        %v663 = vld [vmem:[%s2 + $0x248] sm:$0xff]
        %v664 = vld [vmem:[%s2 + $0x250] sm:$0xff]
        %v665 = vld [vmem:[%s2 + $0x258] sm:$0xff]
        %v666 = vld [vmem:[%s2 + $0x260] sm:$0xff]
        %v667 = vld [vmem:[%s2 + $0x268] sm:$0xff]
        %v668 = vld [vmem:[%s2 + $0x270] sm:$0xff]
        %v669 = vld [vmem:[%s2 + $0x278] sm:$0xff]
        %v670 = vld [vmem:[%s2 + $0x280] sm:$0xff]
        %v671 = vld [vmem:[%s2 + $0x288] sm:$0xff]
        %v672 = vld [vmem:[%s2 + $0x290] sm:$0xff]
        %v673 = vld [vmem:[%s2 + $0x298] sm:$0xff]
        %v674 = vld [vmem:[%s2 + $0x2a0] sm:$0xff]
        %v675 = vld [vmem:[%s2 + $0x2a8] sm:$0xff]
        %v676 = vld [vmem:[%s2 + $0x2b0] sm:$0xff]
        %v677 = vld [vmem:[%s2 + $0x2b8] sm:$0xff]
        %v678 = vld [vmem:[%s2 + $0x2c0] sm:$0xff]
        %v679 = vld [vmem:[%s2 + $0x2c8] sm:$0xff]
        %v680 = vld [vmem:[%s2 + $0x2d0] sm:$0xff]
        %v681 = vld [vmem:[%s2 + $0x2d8] sm:$0xff]
        %v682 = vld [vmem:[%s2 + $0x2e0] sm:$0xff]
        %v683 = vld [vmem:[%s2 + $0x2e8] sm:$0xff]
        %v684 = vld [vmem:[%s2 + $0x2f0] sm:$0xff]
        %v685 = vld [vmem:[%s2 + $0x2f8] sm:$0xff]
        %v686 = vld [vmem:[%s2 + $0x300] sm:$0xff]
        %v687 = vld [vmem:[%s2 + $0x308] sm:$0xff]
        %v688 = vld [vmem:[%s3] sm:$0x1]
        %v690 = vlaneseq
        %v691 = vshrl.u32 %v690, 7
        %v692 = vsub.s32 0, %v691
        %v693 = vrot.slane %v688, %v692
        %vm695 = vcmask 130048
        %v697 = vsel %vm695, %v568, 0
        %v700 = vsel %vm695, %v575, 0
        %v703 = vsel %vm695, %v582, 0
        %v706 = vsel %vm695, %v589, 0
        %708 = vmatprep.subr.mxu0 0.0
        %709 = vmatpush1.msra.mxu0 %v590
        %710 = vmatprep.subr.mxu0 0.0
        %711 = vmatpush1.msra.mxu0 %v591
        %712 = vmatprep.subr.mxu0 0.0
        %713 = vmatpush1.msra.mxu0 %v592
        %714 = vmatprep.subr.mxu0 0.0
        %715 = vmatpush1.msra.mxu0 %v593
        %716 = vmatprep.subr.mxu0 0.0
        %717 = vmatpush1.msra.mxu0 %v594
        %718 = vmatprep.subr.mxu0 0.0
        %719 = vmatpush1.msra.mxu0 %v595
        %720 = vmatprep.subr.mxu0 0.0
        %721 = vmatpush1.msra.mxu0 %v596
        %722 = vmatprep.subr.mxu0 0.0
        %723 = vmatpush1.msra.mxu0 %v597
        %724 = vmatprep.subr.mxu0 0.0
        %725 = vmatpush1.msra.mxu0 %v598
        %726 = vmatprep.subr.mxu0 0.0
        %727 = vmatpush1.msra.mxu0 %v599
        %728 = vmatprep.subr.mxu0 0.0
        %729 = vmatpush1.msra.mxu0 %v600
        %730 = vmatprep.subr.mxu0 0.0
        %731 = vmatpush1.msra.mxu0 %v601
        %732 = vmatprep.subr.mxu0 0.0
        %733 = vmatpush1.msra.mxu0 %v602
        %734 = vmatprep.subr.mxu0 0.0
        %735 = vmatpush1.msra.mxu0 %v603
        %736 = vmatprep.subr.mxu0 0.0
        %737 = vmatpush1.msra.mxu0 %v604
        %738 = vmatprep.subr.mxu0 0.0
        %739 = vmatpush1.msra.mxu0 %v605
        %740 = vmatprep.subr.mxu0 0.0
        %741 = vmatpush1.msra.mxu0 %v606
        %742 = vmatprep.subr.mxu0 0.0
        %743 = vmatpush1.msra.mxu0 %v607
        %744 = vmatprep.subr.mxu0 0.0
        %745 = vmatpush1.msra.mxu0 %v608
        %746 = vmatprep.subr.mxu0 0.0
        %747 = vmatpush1.msra.mxu0 %v609
        %748 = vmatprep.subr.mxu0 0.0
        %749 = vmatpush1.msra.mxu0 %v610
        %750 = vmatprep.subr.mxu0 0.0
        %751 = vmatpush1.msra.mxu0 %v611
        %752 = vmatprep.subr.mxu0 0.0
        %753 = vmatpush1.msra.mxu0 %v612
        %754 = vmatprep.subr.mxu0 0.0
        %755 = vmatpush1.msra.mxu0 %v613
        %756 = vmatprep.subr.mxu0 0.0
        %757 = vmatpush1.msra.mxu0 %v614
        %758 = vmatprep.subr.mxu0 0.0
        %759 = vmatpush1.msra.mxu0 %v615
        %760 = vmatprep.subr.mxu0 0.0
        %761 = vmatpush1.msra.mxu0 %v616
        %762 = vmatprep.subr.mxu0 0.0
        %763 = vmatpush1.msra.mxu0 %v617
        %764 = vmatprep.subr.mxu0 0.0
        %765 = vmatpush1.msra.mxu0 %v618
        %766 = vmatprep.subr.mxu0 0.0
        %767 = vmatpush1.msra.mxu0 %v619
        %768 = vmatprep.subr.mxu0 0.0
        %769 = vmatpush1.msra.mxu0 %v620
        %770 = vmatprep.subr.mxu0 0.0
        %771 = vmatpush1.msra.mxu0 %v621
        %772 = vmatprep.mubr.f32.mxu0 %v563
        %773 = vmatmul.mubr.f32.gmra.mrb[0].mxu0 %v562
        %v774 = vpop.f32.mrb[0].mxu0
        %v775 = vadd.f32 %v693, %v774
        %v776 = vpop.f32.mrb[0].mxu0
        %777 = vmatprep.mubr.f32.mxu0 %v570
        %778 = vmatmul.mubr.f32.gmra.mrb[0].mxu0 %v569
        %v779 = vpop.f32.mrb[0].mxu0
        %v780 = vadd.f32 %v693, %v779
        %v781 = vpop.f32.mrb[0].mxu0
        %782 = vmatprep.mubr.f32.mxu0 %v577
        %783 = vmatmul.mubr.f32.gmra.mrb[0].mxu0 %v576
        %v784 = vpop.f32.mrb[0].mxu0
        %v785 = vadd.f32 %v693, %v784
        %v786 = vpop.f32.mrb[0].mxu0
        %787 = vmatprep.mubr.f32.mxu0 %v584
        %788 = vmatmul.mubr.f32.gmra.mrb[0].mxu0 %v583
        %v789 = vpop.f32.mrb[0].mxu0
        %v790 = vadd.f32 %v693, %v789
        %v791 = vpop.f32.mrb[0].mxu0
        %792 = vdwg.mxu0
        %793 = vmatprep.subr.mxu0 0.0
        %794 = vmatpush1.msra.mxu0 %v622
        %795 = vmatprep.subr.mxu0 0.0
        %796 = vmatpush1.msra.mxu0 %v623
        %797 = vmatprep.subr.mxu0 0.0
        %798 = vmatpush1.msra.mxu0 %v624
        %799 = vmatprep.subr.mxu0 0.0
        %800 = vmatpush1.msra.mxu0 %v625
        %801 = vmatprep.subr.mxu0 0.0
        %802 = vmatpush1.msra.mxu0 %v626
        %803 = vmatprep.subr.mxu0 0.0
        %804 = vmatpush1.msra.mxu0 %v627
        %805 = vmatprep.subr.mxu0 0.0
        %806 = vmatpush1.msra.mxu0 %v628
        %807 = vmatprep.subr.mxu0 0.0
        %808 = vmatpush1.msra.mxu0 %v629
        %809 = vmatprep.subr.mxu0 0.0
        %810 = vmatpush1.msra.mxu0 %v630
        %811 = vmatprep.subr.mxu0 0.0
        %812 = vmatpush1.msra.mxu0 %v631
        %813 = vmatprep.subr.mxu0 0.0
        %814 = vmatpush1.msra.mxu0 %v632
        %815 = vmatprep.subr.mxu0 0.0
        %816 = vmatpush1.msra.mxu0 %v633
        %817 = vmatprep.subr.mxu0 0.0
        %818 = vmatpush1.msra.mxu0 %v634
        %819 = vmatprep.subr.mxu0 0.0
        %820 = vmatpush1.msra.mxu0 %v635
        %821 = vmatprep.subr.mxu0 0.0
        %822 = vmatpush1.msra.mxu0 %v636
        %823 = vmatprep.subr.mxu0 0.0
        %824 = vmatpush1.msra.mxu0 %v637
        %825 = vmatprep.subr.mxu0 0.0
        %826 = vmatpush1.msra.mxu0 %v638
        %827 = vmatprep.subr.mxu0 0.0
        %828 = vmatpush1.msra.mxu0 %v639
        %829 = vmatprep.subr.mxu0 0.0
        %830 = vmatpush1.msra.mxu0 %v640
        %831 = vmatprep.subr.mxu0 0.0
        %832 = vmatpush1.msra.mxu0 %v641
        %833 = vmatprep.subr.mxu0 0.0
        %834 = vmatpush1.msra.mxu0 %v642
        %835 = vmatprep.subr.mxu0 0.0
        %836 = vmatpush1.msra.mxu0 %v643
        %837 = vmatprep.subr.mxu0 0.0
        %838 = vmatpush1.msra.mxu0 %v644
        %839 = vmatprep.subr.mxu0 0.0
        %840 = vmatpush1.msra.mxu0 %v645
        %841 = vmatprep.subr.mxu0 0.0
        %842 = vmatpush1.msra.mxu0 %v646
        %843 = vmatprep.subr.mxu0 0.0
        %844 = vmatpush1.msra.mxu0 %v647
        %845 = vmatprep.subr.mxu0 0.0
        %846 = vmatpush1.msra.mxu0 %v648
        %847 = vmatprep.subr.mxu0 0.0
        %848 = vmatpush1.msra.mxu0 %v649
        %849 = vmatprep.subr.mxu0 0.0
        %850 = vmatpush1.msra.mxu0 %v650
        %851 = vmatprep.subr.mxu0 0.0
        %852 = vmatpush1.msra.mxu0 %v651
        %853 = vmatprep.subr.mxu0 0.0
        %854 = vmatpush1.msra.mxu0 %v652
        %855 = vmatprep.subr.mxu0 0.0
        %856 = vmatpush1.msra.mxu0 %v653
        %857 = vmatprep.mubr.f32.mxu0 %v565
        %858 = vmatmul.mubr.f32.gmra.mrb[0].mxu0 %v564
        %v859 = vpop.f32.mrb[0].mxu0
        %v860 = vadd.f32 %v775, %v859
        %v861 = vpop.f32.mrb[0].mxu0
        %862 = vmatprep.mubr.f32.mxu0 %v572
        %863 = vmatmul.mubr.f32.gmra.mrb[0].mxu0 %v571
        %v864 = vpop.f32.mrb[0].mxu0
        %v865 = vadd.f32 %v780, %v864
        %v866 = vpop.f32.mrb[0].mxu0
        %867 = vmatprep.mubr.f32.mxu0 %v579
        %868 = vmatmul.mubr.f32.gmra.mrb[0].mxu0 %v578
        %v869 = vpop.f32.mrb[0].mxu0
        %v870 = vadd.f32 %v785, %v869
        %v871 = vpop.f32.mrb[0].mxu0
        %872 = vmatprep.mubr.f32.mxu0 %v586
        %873 = vmatmul.mubr.f32.gmra.mrb[0].mxu0 %v585
        %v874 = vpop.f32.mrb[0].mxu0
        %v875 = vadd.f32 %v790, %v874
        %v876 = vpop.f32.mrb[0].mxu0
        %877 = vdwg.mxu0
        %878 = vmatprep.subr.mxu0 0.0
        %879 = vmatpush1.msra.mxu0 %v654
        %880 = vmatprep.subr.mxu0 0.0
        %881 = vmatpush1.msra.mxu0 %v655
        %882 = vmatprep.subr.mxu0 0.0
        %883 = vmatpush1.msra.mxu0 %v656
        %884 = vmatprep.subr.mxu0 0.0
        %885 = vmatpush1.msra.mxu0 %v657
        %886 = vmatprep.subr.mxu0 0.0
        %887 = vmatpush1.msra.mxu0 %v658
        %888 = vmatprep.subr.mxu0 0.0
        %889 = vmatpush1.msra.mxu0 %v659
        %890 = vmatprep.subr.mxu0 0.0
        %891 = vmatpush1.msra.mxu0 %v660
        %892 = vmatprep.subr.mxu0 0.0
        %893 = vmatpush1.msra.mxu0 %v661
        %894 = vmatprep.subr.mxu0 0.0
        %895 = vmatpush1.msra.mxu0 %v662
        %896 = vmatprep.subr.mxu0 0.0
        %897 = vmatpush1.msra.mxu0 %v663
        %898 = vmatprep.subr.mxu0 0.0
        %899 = vmatpush1.msra.mxu0 %v664
        %900 = vmatprep.subr.mxu0 0.0
        %901 = vmatpush1.msra.mxu0 %v665
        %902 = vmatprep.subr.mxu0 0.0
        %903 = vmatpush1.msra.mxu0 %v666
        %904 = vmatprep.subr.mxu0 0.0
        %905 = vmatpush1.msra.mxu0 %v667
        %906 = vmatprep.subr.mxu0 0.0
        %907 = vmatpush1.msra.mxu0 %v668
        %908 = vmatprep.subr.mxu0 0.0
        %909 = vmatpush1.msra.mxu0 %v669
        %910 = vmatprep.subr.mxu0 0.0
        %911 = vmatpush1.msra.mxu0 %v670
        %912 = vmatprep.subr.mxu0 0.0
        %913 = vmatpush1.msra.mxu0 %v671
        %914 = vmatprep.subr.mxu0 0.0
        %915 = vmatpush1.msra.mxu0 %v672
        %916 = vmatprep.subr.mxu0 0.0
        %917 = vmatpush1.msra.mxu0 %v673
        %918 = vmatprep.subr.mxu0 0.0
        %919 = vmatpush1.msra.mxu0 %v674
        %920 = vmatprep.subr.mxu0 0.0
        %921 = vmatpush1.msra.mxu0 %v675
        %922 = vmatprep.subr.mxu0 0.0
        %923 = vmatpush1.msra.mxu0 %v676
        %924 = vmatprep.subr.mxu0 0.0
        %925 = vmatpush1.msra.mxu0 %v677
        %926 = vmatprep.subr.mxu0 0.0
        %927 = vmatpush1.msra.mxu0 %v678
        %928 = vmatprep.subr.mxu0 0.0
        %929 = vmatpush1.msra.mxu0 %v679
        %930 = vmatprep.subr.mxu0 0.0
        %931 = vmatpush1.msra.mxu0 %v680
        %932 = vmatprep.subr.mxu0 0.0
        %933 = vmatpush1.msra.mxu0 %v681
        %934 = vmatprep.subr.mxu0 0.0
        %935 = vmatpush1.msra.mxu0 %v682
        %936 = vmatprep.subr.mxu0 0.0
        %937 = vmatpush1.msra.mxu0 %v683
        %938 = vmatprep.subr.mxu0 0.0
        %939 = vmatpush1.msra.mxu0 %v684
        %940 = vmatprep.subr.mxu0 0.0
        %941 = vmatpush1.msra.mxu0 %v685
        %942 = vmatprep.mubr.f32.mxu0 %v567
        %943 = vmatmul.mubr.f32.gmra.mrb[0].mxu0 %v566
        %v944 = vpop.f32.mrb[0].mxu0
        %v945 = vadd.f32 %v860, %v944
        %v946 = vpop.f32.mrb[0].mxu0
        %947 = vmatprep.mubr.f32.mxu0 %v574
        %948 = vmatmul.mubr.f32.gmra.mrb[0].mxu0 %v573
        %v949 = vpop.f32.mrb[0].mxu0
        %v950 = vadd.f32 %v865, %v949
        %v951 = vpop.f32.mrb[0].mxu0
        %952 = vmatprep.mubr.f32.mxu0 %v581
        %953 = vmatmul.mubr.f32.gmra.mrb[0].mxu0 %v580
        %v954 = vpop.f32.mrb[0].mxu0
        %v955 = vadd.f32 %v870, %v954
        %v956 = vpop.f32.mrb[0].mxu0
        %957 = vmatprep.mubr.f32.mxu0 %v588
        %958 = vmatmul.mubr.f32.gmra.mrb[0].mxu0 %v587
        %v959 = vpop.f32.mrb[0].mxu0
        %v960 = vadd.f32 %v875, %v959
        %v961 = vpop.f32.mrb[0].mxu0
        %962 = vdwg.mxu0
        %963 = vmatprep.subr.mxu0 0.0
        %964 = vmatpush1.msra.mxu0 %v686
        %965 = vmatprep.subr.mxu0 0.0
        %966 = vmatpush1.msra.mxu0 %v687
        %967 = vmatprep.subr.mxu0 0.0
        %968 = vmatpush1.msra.mxu0 0.0
        %969 = vmatprep.subr.mxu0 0.0
        %970 = vmatpush1.msra.mxu0 0.0
        %971 = vmatprep.subr.mxu0 0.0
        %972 = vmatpush1.msra.mxu0 0.0
        %973 = vmatprep.subr.mxu0 0.0
        %974 = vmatpush1.msra.mxu0 0.0
        %975 = vmatprep.subr.mxu0 0.0
        %976 = vmatpush1.msra.mxu0 0.0
        %977 = vmatprep.subr.mxu0 0.0
        %978 = vmatpush1.msra.mxu0 0.0
        %979 = vmatprep.subr.mxu0 0.0
        %980 = vmatpush1.msra.mxu0 0.0
        %981 = vmatprep.subr.mxu0 0.0
        %982 = vmatpush1.msra.mxu0 0.0
        %983 = vmatprep.subr.mxu0 0.0
        %984 = vmatpush1.msra.mxu0 0.0
        %985 = vmatprep.subr.mxu0 0.0
        %986 = vmatpush1.msra.mxu0 0.0
        %987 = vmatprep.subr.mxu0 0.0
        %988 = vmatpush1.msra.mxu0 0.0
        %989 = vmatprep.subr.mxu0 0.0
        %990 = vmatpush1.msra.mxu0 0.0
        %991 = vmatprep.subr.mxu0 0.0
        %992 = vmatpush1.msra.mxu0 0.0
        %993 = vmatprep.subr.mxu0 0.0
        %994 = vmatpush1.msra.mxu0 0.0
        %995 = vmatprep.subr.mxu0 0.0
        %996 = vmatpush1.msra.mxu0 0.0
        %997 = vmatprep.subr.mxu0 0.0
        %998 = vmatpush1.msra.mxu0 0.0
        %999 = vmatprep.subr.mxu0 0.0
        %1000 = vmatpush1.msra.mxu0 0.0
        %1001 = vmatprep.subr.mxu0 0.0
        %1002 = vmatpush1.msra.mxu0 0.0
        %1003 = vmatprep.subr.mxu0 0.0
        %1004 = vmatpush1.msra.mxu0 0.0
        %1005 = vmatprep.subr.mxu0 0.0
        %1006 = vmatpush1.msra.mxu0 0.0
        %1007 = vmatprep.subr.mxu0 0.0
        %1008 = vmatpush1.msra.mxu0 0.0
        %1009 = vmatprep.subr.mxu0 0.0
        %1010 = vmatpush1.msra.mxu0 0.0
        %1011 = vmatprep.subr.mxu0 0.0
        %1012 = vmatpush1.msra.mxu0 0.0
        %1013 = vmatprep.subr.mxu0 0.0
        %1014 = vmatpush1.msra.mxu0 0.0
        %1015 = vmatprep.subr.mxu0 0.0
        %1016 = vmatpush1.msra.mxu0 0.0
        %1017 = vmatprep.subr.mxu0 0.0
        %1018 = vmatpush1.msra.mxu0 0.0
        %1019 = vmatprep.subr.mxu0 0.0
        %1020 = vmatpush1.msra.mxu0 0.0
        %1021 = vmatprep.subr.mxu0 0.0
        %1022 = vmatpush1.msra.mxu0 0.0
        %1023 = vmatprep.subr.mxu0 0.0
        %1024 = vmatpush1.msra.mxu0 0.0
        %1025 = vmatprep.subr.mxu0 0.0
        %1026 = vmatpush1.msra.mxu0 0.0
        %1027 = vmatprep.mubr.f32.mxu0 0.0
        %1028 = vmatmul.mubr.f32.gmra.mrb[0].mxu0 %v697
        %v1029 = vpop.f32.mrb[0].mxu0
        %v1030 = vadd.f32 %v945, %v1029
        %v1031 = vpop.f32.mrb[0].mxu0
        %1032 = vmatprep.mubr.f32.mxu0 0.0
        %1033 = vmatmul.mubr.f32.gmra.mrb[0].mxu0 %v700
        %v1034 = vpop.f32.mrb[0].mxu0
        %v1035 = vadd.f32 %v950, %v1034
        %v1036 = vpop.f32.mrb[0].mxu0
        %1037 = vmatprep.mubr.f32.mxu0 0.0
        %1038 = vmatmul.mubr.f32.gmra.mrb[0].mxu0 %v703
        %v1039 = vpop.f32.mrb[0].mxu0
        %v1040 = vadd.f32 %v955, %v1039
        %v1041 = vpop.f32.mrb[0].mxu0
        %1042 = vmatprep.mubr.f32.mxu0 0.0
        %1043 = vmatmul.mubr.f32.gmra.mrb[0].mxu0 %v706
        %v1044 = vpop.f32.mrb[0].mxu0
        %v1045 = vadd.f32 %v960, %v1044
        %v1046 = vpop.f32.mrb[0].mxu0
        %1047 = vdwg.mxu0
        %v1048 = vmax.f32 %v1030, 0.0
        %v1049 = vmax.f32 %v1035, 0.0
        %v1050 = vmax.f32 %v1040, 0.0
        %v1051 = vmax.f32 %v1045, 0.0
        %v1052 = vld [vmem:[%s4] sm:$0xff]
        %v1053 = vld [vmem:[%s4 + $0x8] sm:$0xff]
        %v1054 = vld [vmem:[%s4 + $0x10] sm:$0xff]
        %v1055 = vld [vmem:[%s4 + $0x18] sm:$0xff]
        %v1056 = vld [vmem:[%s4 + $0x20] sm:$0xff]
        %v1057 = vld [vmem:[%s4 + $0x28] sm:$0xff]
        %v1058 = vld [vmem:[%s4 + $0x30] sm:$0xff]
        %v1059 = vld [vmem:[%s4 + $0x38] sm:$0xff]
        %v1060 = vld [vmem:[%s4 + $0x40] sm:$0xff]
        %v1061 = vld [vmem:[%s4 + $0x48] sm:$0xff]
        %v1062 = vld [vmem:[%s4 + $0x50] sm:$0xff]
        %v1063 = vld [vmem:[%s4 + $0x58] sm:$0xff]
        %v1064 = vld [vmem:[%s4 + $0x60] sm:$0xff]
        %v1065 = vld [vmem:[%s4 + $0x68] sm:$0xff]
        %v1066 = vld [vmem:[%s4 + $0x70] sm:$0xff]
        %v1067 = vld [vmem:[%s4 + $0x78] sm:$0xff]
        %v1068 = vld [vmem:[%s5] sm:$0x1]
        %v1070 = vlaneseq
        %v1071 = vshrl.u32 %v1070, 7
        %v1072 = vsub.s32 0, %v1071
        %v1073 = vrot.slane %v1068, %v1072
        %1075 = vmatprep.subr.mxu0 0.0
        %1076 = vmatpush1.msra.mxu0 %v1052
        %1077 = vmatprep.subr.mxu0 0.0
        %1078 = vmatpush1.msra.mxu0 %v1053
        %1079 = vmatprep.subr.mxu0 0.0
        %1080 = vmatpush1.msra.mxu0 %v1054
        %1081 = vmatprep.subr.mxu0 0.0
        %1082 = vmatpush1.msra.mxu0 %v1055
        %1083 = vmatprep.subr.mxu0 0.0
        %1084 = vmatpush1.msra.mxu0 %v1056
        %1085 = vmatprep.subr.mxu0 0.0
        %1086 = vmatpush1.msra.mxu0 %v1057
        %1087 = vmatprep.subr.mxu0 0.0
        %1088 = vmatpush1.msra.mxu0 %v1058
        %1089 = vmatprep.subr.mxu0 0.0
        %1090 = vmatpush1.msra.mxu0 %v1059
        %1091 = vmatprep.subr.mxu0 0.0
        %1092 = vmatpush1.msra.mxu0 %v1060
        %1093 = vmatprep.subr.mxu0 0.0
        %1094 = vmatpush1.msra.mxu0 %v1061
        %1095 = vmatprep.subr.mxu0 0.0
        %1096 = vmatpush1.msra.mxu0 %v1062
        %1097 = vmatprep.subr.mxu0 0.0
        %1098 = vmatpush1.msra.mxu0 %v1063
        %1099 = vmatprep.subr.mxu0 0.0
        %1100 = vmatpush1.msra.mxu0 %v1064
        %1101 = vmatprep.subr.mxu0 0.0
        %1102 = vmatpush1.msra.mxu0 %v1065
        %1103 = vmatprep.subr.mxu0 0.0
        %1104 = vmatpush1.msra.mxu0 %v1066
        %1105 = vmatprep.subr.mxu0 0.0
        %1106 = vmatpush1.msra.mxu0 %v1067
        %1107 = vmatprep.subr.mxu0 0.0
        %1108 = vmatpush1.msra.mxu0 0.0
        %1109 = vmatprep.subr.mxu0 0.0
        %1110 = vmatpush1.msra.mxu0 0.0
        %1111 = vmatprep.subr.mxu0 0.0
        %1112 = vmatpush1.msra.mxu0 0.0
        %1113 = vmatprep.subr.mxu0 0.0
        %1114 = vmatpush1.msra.mxu0 0.0
        %1115 = vmatprep.subr.mxu0 0.0
        %1116 = vmatpush1.msra.mxu0 0.0
        %1117 = vmatprep.subr.mxu0 0.0
        %1118 = vmatpush1.msra.mxu0 0.0
        %1119 = vmatprep.subr.mxu0 0.0
        %1120 = vmatpush1.msra.mxu0 0.0
        %1121 = vmatprep.subr.mxu0 0.0
        %1122 = vmatpush1.msra.mxu0 0.0
        %1123 = vmatprep.subr.mxu0 0.0
        %1124 = vmatpush1.msra.mxu0 0.0
        %1125 = vmatprep.subr.mxu0 0.0
        %1126 = vmatpush1.msra.mxu0 0.0
        %1127 = vmatprep.subr.mxu0 0.0
        %1128 = vmatpush1.msra.mxu0 0.0
        %1129 = vmatprep.subr.mxu0 0.0
        %1130 = vmatpush1.msra.mxu0 0.0
        %1131 = vmatprep.subr.mxu0 0.0
        %1132 = vmatpush1.msra.mxu0 0.0
        %1133 = vmatprep.subr.mxu0 0.0
        %1134 = vmatpush1.msra.mxu0 0.0
        %1135 = vmatprep.subr.mxu0 0.0
        %1136 = vmatpush1.msra.mxu0 0.0
        %1137 = vmatprep.subr.mxu0 0.0
        %1138 = vmatpush1.msra.mxu0 0.0
        %1139 = vmatprep.mubr.f32.mxu0 0.0
        %1140 = vmatmul.mubr.f32.gmra.mrb[0].mxu0 %v1048
        %v1141 = vpop.f32.mrb[0].mxu0
        %v1142 = vadd.f32 %v1073, %v1141
        %v1143 = vpop.f32.mrb[0].mxu0
        %1144 = vmatprep.mubr.f32.mxu0 0.0
        %1145 = vmatmul.mubr.f32.gmra.mrb[0].mxu0 %v1049
        %v1146 = vpop.f32.mrb[0].mxu0
        %v1147 = vadd.f32 %v1073, %v1146
        %v1148 = vpop.f32.mrb[0].mxu0
        %1149 = vmatprep.mubr.f32.mxu0 0.0
        %1150 = vmatmul.mubr.f32.gmra.mrb[0].mxu0 %v1050
        %v1151 = vpop.f32.mrb[0].mxu0
        %v1152 = vadd.f32 %v1073, %v1151
        %v1153 = vpop.f32.mrb[0].mxu0
        %1154 = vmatprep.mubr.f32.mxu0 0.0
        %1155 = vmatmul.mubr.f32.gmra.mrb[0].mxu0 %v1051
        %v1156 = vpop.f32.mrb[0].mxu0
        %v1157 = vadd.f32 %v1073, %v1156
        %v1158 = vpop.f32.mrb[0].mxu0
        %1159 = vdwg.mxu0
        %v1160 = vmax.f32 %v1142, 0.0
        %v1161 = vmax.f32 %v1147, 0.0
        %v1162 = vmax.f32 %v1152, 0.0
        %v1163 = vmax.f32 %v1157, 0.0
        %v1164 = vld [vmem:[%s6] sm:$0xff]
        %v1165 = vld [vmem:[%s6 + $0x8] sm:$0xff]
        %v1166 = vld [vmem:[%s6 + $0x10] sm:$0xff]
        %v1167 = vld [vmem:[%s6 + $0x18] sm:$0xff]
        %v1168 = vld [vmem:[%s6 + $0x20] sm:$0xff]
        %v1169 = vld [vmem:[%s6 + $0x28] sm:$0xff]
        %v1170 = vld [vmem:[%s6 + $0x30] sm:$0xff]
        %v1171 = vld [vmem:[%s6 + $0x38] sm:$0xff]
        %v1172 = vld [vmem:[%s7] sm:$0x1]
        %v1174 = vlaneseq
        %v1175 = vshrl.u32 %v1174, 7
        %v1176 = vsub.s32 0, %v1175
        %v1177 = vrot.slane %v1172, %v1176
        %vm1179 = vcmask 523264
        %v1181 = vsel %vm1179, %v1160, 0
        %v1184 = vsel %vm1179, %v1161, 0
        %v1187 = vsel %vm1179, %v1162, 0
        %v1190 = vsel %vm1179, %v1163, 0
        %1192 = vmatprep.subr.mxu0 0.0
        %1193 = vmatpush1.msra.mxu0 %v1164
        %1194 = vmatprep.subr.mxu0 0.0
        %1195 = vmatpush1.msra.mxu0 %v1165
        %1196 = vmatprep.subr.mxu0 0.0
        %1197 = vmatpush1.msra.mxu0 %v1166
        %1198 = vmatprep.subr.mxu0 0.0
        %1199 = vmatpush1.msra.mxu0 %v1167
        %1200 = vmatprep.subr.mxu0 0.0
        %1201 = vmatpush1.msra.mxu0 %v1168
        %1202 = vmatprep.subr.mxu0 0.0
        %1203 = vmatpush1.msra.mxu0 %v1169
        %1204 = vmatprep.subr.mxu0 0.0
        %1205 = vmatpush1.msra.mxu0 %v1170
        %1206 = vmatprep.subr.mxu0 0.0
        %1207 = vmatpush1.msra.mxu0 %v1171
        %1208 = vmatprep.subr.mxu0 0.0
        %1209 = vmatpush1.msra.mxu0 0.0
        %1210 = vmatprep.subr.mxu0 0.0
        %1211 = vmatpush1.msra.mxu0 0.0
        %1212 = vmatprep.subr.mxu0 0.0
        %1213 = vmatpush1.msra.mxu0 0.0
        %1214 = vmatprep.subr.mxu0 0.0
        %1215 = vmatpush1.msra.mxu0 0.0
        %1216 = vmatprep.subr.mxu0 0.0
        %1217 = vmatpush1.msra.mxu0 0.0
        %1218 = vmatprep.subr.mxu0 0.0
        %1219 = vmatpush1.msra.mxu0 0.0
        %1220 = vmatprep.subr.mxu0 0.0
        %1221 = vmatpush1.msra.mxu0 0.0
        %1222 = vmatprep.subr.mxu0 0.0
        %1223 = vmatpush1.msra.mxu0 0.0
        %1224 = vmatprep.subr.mxu0 0.0
        %1225 = vmatpush1.msra.mxu0 0.0
        %1226 = vmatprep.subr.mxu0 0.0
        %1227 = vmatpush1.msra.mxu0 0.0
        %1228 = vmatprep.subr.mxu0 0.0
        %1229 = vmatpush1.msra.mxu0 0.0
        %1230 = vmatprep.subr.mxu0 0.0
        %1231 = vmatpush1.msra.mxu0 0.0
        %1232 = vmatprep.subr.mxu0 0.0
        %1233 = vmatpush1.msra.mxu0 0.0
        %1234 = vmatprep.subr.mxu0 0.0
        %1235 = vmatpush1.msra.mxu0 0.0
        %1236 = vmatprep.subr.mxu0 0.0
        %1237 = vmatpush1.msra.mxu0 0.0
        %1238 = vmatprep.subr.mxu0 0.0
        %1239 = vmatpush1.msra.mxu0 0.0
        %1240 = vmatprep.subr.mxu0 0.0
        %1241 = vmatpush1.msra.mxu0 0.0
        %1242 = vmatprep.subr.mxu0 0.0
        %1243 = vmatpush1.msra.mxu0 0.0
        %1244 = vmatprep.subr.mxu0 0.0
        %1245 = vmatpush1.msra.mxu0 0.0
        %1246 = vmatprep.subr.mxu0 0.0
        %1247 = vmatpush1.msra.mxu0 0.0
        %1248 = vmatprep.subr.mxu0 0.0
        %1249 = vmatpush1.msra.mxu0 0.0
        %1250 = vmatprep.subr.mxu0 0.0
        %1251 = vmatpush1.msra.mxu0 0.0
        %1252 = vmatprep.subr.mxu0 0.0
        %1253 = vmatpush1.msra.mxu0 0.0
        %1254 = vmatprep.subr.mxu0 0.0
        %1255 = vmatpush1.msra.mxu0 0.0
        %1256 = vmatprep.mubr.f32.mxu0 0.0
        %1257 = vmatmul.mubr.f32.gmra.mrb[0].mxu0 %v1181
        %v1258 = vpop.f32.mrb[0].mxu0
        %v1259 = vadd.f32 %v1177, %v1258
        %v1260 = vpop.f32.mrb[0].mxu0
        %1261 = vmatprep.mubr.f32.mxu0 0.0
        %1262 = vmatmul.mubr.f32.gmra.mrb[0].mxu0 %v1184
        %v1263 = vpop.f32.mrb[0].mxu0
        %v1264 = vadd.f32 %v1177, %v1263
        %v1265 = vpop.f32.mrb[0].mxu0
        %1266 = vmatprep.mubr.f32.mxu0 0.0
        %1267 = vmatmul.mubr.f32.gmra.mrb[0].mxu0 %v1187
        %v1268 = vpop.f32.mrb[0].mxu0
        %v1269 = vadd.f32 %v1177, %v1268
        %v1270 = vpop.f32.mrb[0].mxu0
        %1271 = vmatprep.mubr.f32.mxu0 0.0
        %1272 = vmatmul.mubr.f32.gmra.mrb[0].mxu0 %v1190
        %v1273 = vpop.f32.mrb[0].mxu0
        %v1274 = vadd.f32 %v1177, %v1273
        %v1275 = vpop.f32.mrb[0].mxu0
        %1276 = vdwg.mxu0
        %vm1277 = vcmask 261120
        %1278 = vst.msk [vmem:[%s559] sm:$0xff] %vm1277, %v1259
        %1279 = vst.msk [vmem:[%s559 + $0x8] sm:$0xff] %vm1277, %v1264
        %1280 = vst.msk [vmem:[%s559 + $0x10] sm:$0xff] %vm1277, %v1269
        %1281 = vst.msk [vmem:[%s559 + $0x18] sm:$0xff] %vm1277, %v1274
        %v1282 = vld [vmem:[%s553] sm:$0xff]
        %v1283 = vld [vmem:[%s553 + $0x8] sm:$0xff]
        %v1284 = vld [vmem:[%s553 + $0x10] sm:$0xff]
        %v1285 = vld [vmem:[%s553 + $0x18] sm:$0xff]
        %v1286 = vlaneseq
        %v1287 = vand.u32 %v1286, 127
        %1288 = vset.pattern.permute.xlu0 0
        %1289 = vperm.xlu0 %1288, %v1282
        %v1290 = vpop.permute.xlu0 %1289
        %1291 = vset.pattern.permute.xlu0 0
        %1292 = vperm.xlu0 %1291, %v1283
        %v1293 = vpop.permute.xlu0 %1292
        %1294 = vset.pattern.permute.xlu0 0
        %1295 = vperm.xlu0 %1294, %v1284
        %v1296 = vpop.permute.xlu0 %1295
        %1297 = vset.pattern.permute.xlu0 0
        %1298 = vperm.xlu0 %1297, %v1285
        %v1299 = vpop.permute.xlu0 %1298
        %vm1300 = vcmp.eq.s32.totalorder %v1287, %v1290
        %vm1301 = vcmp.eq.s32.totalorder %v1287, %v1293
        %vm1302 = vcmp.eq.s32.totalorder %v1287, %v1296
        %vm1303 = vcmp.eq.s32.totalorder %v1287, %v1299
        %v1304 = vsel %vm1300, 1, 0
        %v1305 = vsel %vm1301, 1, 0
        %v1306 = vsel %vm1302, 1, 0
        %v1307 = vsel %vm1303, 1, 0
        %v1308 = vcvt.s32.f32 %v1304
        %v1309 = vcvt.s32.f32 %v1305
        %v1310 = vcvt.s32.f32 %v1306
        %v1311 = vcvt.s32.f32 %v1307
        %v1312 = vld [vmem:[%s8] sm:$0xff]
        %v1313 = vld [vmem:[%s8 + $0x8] sm:$0xff]
        %v1314 = vld [vmem:[%s8 + $0x10] sm:$0xff]
        %v1315 = vld [vmem:[%s8 + $0x18] sm:$0xff]
        %v1316 = vld [vmem:[%s9] sm:$0xff]
        %v1317 = vld [vmem:[%s9 + $0x8] sm:$0x3]
        %vm1318 = vcmask 80896
        %v1320 = vsel %vm1318, %v1308, 0
        %v1323 = vsel %vm1318, %v1309, 0
        %v1326 = vsel %vm1318, %v1310, 0
        %v1329 = vsel %vm1318, %v1311, 0
        %vm1331 = vcmask 1041408
        %v1333 = vsel %vm1331, %v1317, 0
        %1335 = vmatprep.subr.mxu0 0.0
        %1336 = vmatpush1.msra.mxu0 %v1316
        %1337 = vmatprep.subr.mxu0 0.0
        %1338 = vmatpush1.msra.mxu0 %v1333
        %1339 = vmatprep.subr.mxu0 0.0
        %1340 = vmatpush1.msra.mxu0 0.0
        %1341 = vmatprep.subr.mxu0 0.0
        %1342 = vmatpush1.msra.mxu0 0.0
        %1343 = vmatprep.subr.mxu0 0.0
        %1344 = vmatpush1.msra.mxu0 0.0
        %1345 = vmatprep.subr.mxu0 0.0
        %1346 = vmatpush1.msra.mxu0 0.0
        %1347 = vmatprep.subr.mxu0 0.0
        %1348 = vmatpush1.msra.mxu0 0.0
        %1349 = vmatprep.subr.mxu0 0.0
        %1350 = vmatpush1.msra.mxu0 0.0
        %1351 = vmatprep.subr.mxu0 0.0
        %1352 = vmatpush1.msra.mxu0 0.0
        %1353 = vmatprep.subr.mxu0 0.0
        %1354 = vmatpush1.msra.mxu0 0.0
        %1355 = vmatprep.subr.mxu0 0.0
        %1356 = vmatpush1.msra.mxu0 0.0
        %1357 = vmatprep.subr.mxu0 0.0
        %1358 = vmatpush1.msra.mxu0 0.0
        %1359 = vmatprep.subr.mxu0 0.0
        %1360 = vmatpush1.msra.mxu0 0.0
        %1361 = vmatprep.subr.mxu0 0.0
        %1362 = vmatpush1.msra.mxu0 0.0
        %1363 = vmatprep.subr.mxu0 0.0
        %1364 = vmatpush1.msra.mxu0 0.0
        %1365 = vmatprep.subr.mxu0 0.0
        %1366 = vmatpush1.msra.mxu0 0.0
        %1367 = vmatprep.subr.mxu0 0.0
        %1368 = vmatpush1.msra.mxu0 0.0
        %1369 = vmatprep.subr.mxu0 0.0
        %1370 = vmatpush1.msra.mxu0 0.0
        %1371 = vmatprep.subr.mxu0 0.0
        %1372 = vmatpush1.msra.mxu0 0.0
        %1373 = vmatprep.subr.mxu0 0.0
        %1374 = vmatpush1.msra.mxu0 0.0
        %1375 = vmatprep.subr.mxu0 0.0
        %1376 = vmatpush1.msra.mxu0 0.0
        %1377 = vmatprep.subr.mxu0 0.0
        %1378 = vmatpush1.msra.mxu0 0.0
        %1379 = vmatprep.subr.mxu0 0.0
        %1380 = vmatpush1.msra.mxu0 0.0
        %1381 = vmatprep.subr.mxu0 0.0
        %1382 = vmatpush1.msra.mxu0 0.0
        %1383 = vmatprep.subr.mxu0 0.0
        %1384 = vmatpush1.msra.mxu0 0.0
        %1385 = vmatprep.subr.mxu0 0.0
        %1386 = vmatpush1.msra.mxu0 0.0
        %1387 = vmatprep.subr.mxu0 0.0
        %1388 = vmatpush1.msra.mxu0 0.0
        %1389 = vmatprep.subr.mxu0 0.0
        %1390 = vmatpush1.msra.mxu0 0.0
        %1391 = vmatprep.subr.mxu0 0.0
        %1392 = vmatpush1.msra.mxu0 0.0
        %1393 = vmatprep.subr.mxu0 0.0
        %1394 = vmatpush1.msra.mxu0 0.0
        %1395 = vmatprep.subr.mxu0 0.0
        %1396 = vmatpush1.msra.mxu0 0.0
        %1397 = vmatprep.subr.mxu0 0.0
        %1398 = vmatpush1.msra.mxu0 0.0
        %1399 = vmatprep.mubr.f32.mxu0 0.0
        %1400 = vmatmul.mubr.f32.gmra.mrb[0].mxu0 %v1320
        %v1401 = vpop.f32.mrb[0].mxu0
        %v1402 = vadd.f32 0.0, %v1401
        %v1403 = vpop.f32.mrb[0].mxu0
        %1404 = vmatprep.mubr.f32.mxu0 0.0
        %1405 = vmatmul.mubr.f32.gmra.mrb[0].mxu0 %v1323
        %v1406 = vpop.f32.mrb[0].mxu0
        %v1407 = vadd.f32 0.0, %v1406
        %v1408 = vpop.f32.mrb[0].mxu0
        %1409 = vmatprep.mubr.f32.mxu0 0.0
        %1410 = vmatmul.mubr.f32.gmra.mrb[0].mxu0 %v1326
        %v1411 = vpop.f32.mrb[0].mxu0
        %v1412 = vadd.f32 0.0, %v1411
        %v1413 = vpop.f32.mrb[0].mxu0
        %1414 = vmatprep.mubr.f32.mxu0 0.0
        %1415 = vmatmul.mubr.f32.gmra.mrb[0].mxu0 %v1329
        %v1416 = vpop.f32.mrb[0].mxu0
        %v1417 = vadd.f32 0.0, %v1416
        %v1418 = vpop.f32.mrb[0].mxu0
        %1419 = vdwg.mxu0
        %v1421 = vsel %vm1277, %v1259, 0
        %v1424 = vsel %vm1277, %v1264, 0
        %v1427 = vsel %vm1277, %v1269, 0
        %v1430 = vsel %vm1277, %v1274, 0
        %1432 = vmatprep.subr.mxu0 0.0
        %1433 = vmatpush1.msra.mxu0 %v1312
        %1434 = vmatprep.subr.mxu0 0.0
        %1435 = vmatpush1.msra.mxu0 %v1313
        %1436 = vmatprep.subr.mxu0 0.0
        %1437 = vmatpush1.msra.mxu0 %v1314
        %1438 = vmatprep.subr.mxu0 0.0
        %1439 = vmatpush1.msra.mxu0 %v1315
        %1440 = vmatprep.subr.mxu0 0.0
        %1441 = vmatpush1.msra.mxu0 0.0
        %1442 = vmatprep.subr.mxu0 0.0
        %1443 = vmatpush1.msra.mxu0 0.0
        %1444 = vmatprep.subr.mxu0 0.0
        %1445 = vmatpush1.msra.mxu0 0.0
        %1446 = vmatprep.subr.mxu0 0.0
        %1447 = vmatpush1.msra.mxu0 0.0
        %1448 = vmatprep.subr.mxu0 0.0
        %1449 = vmatpush1.msra.mxu0 0.0
        %1450 = vmatprep.subr.mxu0 0.0
        %1451 = vmatpush1.msra.mxu0 0.0
        %1452 = vmatprep.subr.mxu0 0.0
        %1453 = vmatpush1.msra.mxu0 0.0
        %1454 = vmatprep.subr.mxu0 0.0
        %1455 = vmatpush1.msra.mxu0 0.0
        %1456 = vmatprep.subr.mxu0 0.0
        %1457 = vmatpush1.msra.mxu0 0.0
        %1458 = vmatprep.subr.mxu0 0.0
        %1459 = vmatpush1.msra.mxu0 0.0
        %1460 = vmatprep.subr.mxu0 0.0
        %1461 = vmatpush1.msra.mxu0 0.0
        %1462 = vmatprep.subr.mxu0 0.0
        %1463 = vmatpush1.msra.mxu0 0.0
        %1464 = vmatprep.subr.mxu0 0.0
        %1465 = vmatpush1.msra.mxu0 0.0
        %1466 = vmatprep.subr.mxu0 0.0
        %1467 = vmatpush1.msra.mxu0 0.0
        %1468 = vmatprep.subr.mxu0 0.0
        %1469 = vmatpush1.msra.mxu0 0.0
        %1470 = vmatprep.subr.mxu0 0.0
        %1471 = vmatpush1.msra.mxu0 0.0
        %1472 = vmatprep.subr.mxu0 0.0
        %1473 = vmatpush1.msra.mxu0 0.0
        %1474 = vmatprep.subr.mxu0 0.0
        %1475 = vmatpush1.msra.mxu0 0.0
        %1476 = vmatprep.subr.mxu0 0.0
        %1477 = vmatpush1.msra.mxu0 0.0
        %1478 = vmatprep.subr.mxu0 0.0
        %1479 = vmatpush1.msra.mxu0 0.0
        %1480 = vmatprep.subr.mxu0 0.0
        %1481 = vmatpush1.msra.mxu0 0.0
        %1482 = vmatprep.subr.mxu0 0.0
        %1483 = vmatpush1.msra.mxu0 0.0
        %1484 = vmatprep.subr.mxu0 0.0
        %1485 = vmatpush1.msra.mxu0 0.0
        %1486 = vmatprep.subr.mxu0 0.0
        %1487 = vmatpush1.msra.mxu0 0.0
        %1488 = vmatprep.subr.mxu0 0.0
        %1489 = vmatpush1.msra.mxu0 0.0
        %1490 = vmatprep.subr.mxu0 0.0
        %1491 = vmatpush1.msra.mxu0 0.0
        %1492 = vmatprep.subr.mxu0 0.0
        %1493 = vmatpush1.msra.mxu0 0.0
        %1494 = vmatprep.subr.mxu0 0.0
        %1495 = vmatpush1.msra.mxu0 0.0
        %1496 = vmatprep.mubr.f32.mxu0 0.0
        %1497 = vmatmul.mubr.f32.gmra.mrb[0].mxu0 %v1421
        %v1498 = vpop.f32.mrb[0].mxu0
        %v1499 = vadd.f32 %v1402, %v1498
        %v1500 = vpop.f32.mrb[0].mxu0
        %1501 = vmatprep.mubr.f32.mxu0 0.0
        %1502 = vmatmul.mubr.f32.gmra.mrb[0].mxu0 %v1424
        %v1503 = vpop.f32.mrb[0].mxu0
        %v1504 = vadd.f32 %v1407, %v1503
        %v1505 = vpop.f32.mrb[0].mxu0
        %1506 = vmatprep.mubr.f32.mxu0 0.0
        %1507 = vmatmul.mubr.f32.gmra.mrb[0].mxu0 %v1427
        %v1508 = vpop.f32.mrb[0].mxu0
        %v1509 = vadd.f32 %v1412, %v1508
        %v1510 = vpop.f32.mrb[0].mxu0
        %1511 = vmatprep.mubr.f32.mxu0 0.0
        %1512 = vmatmul.mubr.f32.gmra.mrb[0].mxu0 %v1430
        %v1513 = vpop.f32.mrb[0].mxu0
        %v1514 = vadd.f32 %v1417, %v1513
        %v1515 = vpop.f32.mrb[0].mxu0
        %1516 = vdwg.mxu0
        %v1517 = vld [vmem:[%s10] sm:$0x1]
        %v1519 = vlaneseq
        %v1520 = vshrl.u32 %v1519, 7
        %v1521 = vsub.s32 0, %v1520
        %v1522 = vrot.slane %v1517, %v1521
        %v1524 = vadd.f32 %v1499, %v1522
        %v1525 = vadd.f32 %v1504, %v1522
        %v1526 = vadd.f32 %v1509, %v1522
        %v1527 = vadd.f32 %v1514, %v1522
        %v1528 = vmax.f32 %v1524, 0.0
        %v1529 = vmax.f32 %v1525, 0.0
        %v1530 = vmax.f32 %v1526, 0.0
        %v1531 = vmax.f32 %v1527, 0.0
        %v1532 = vld [vmem:[%s11] sm:$0xff]
        %v1533 = vld [vmem:[%s11 + $0x8] sm:$0xff]
        %v1534 = vld [vmem:[%s11 + $0x10] sm:$0xff]
        %v1535 = vld [vmem:[%s11 + $0x18] sm:$0xff]
        %v1536 = vld [vmem:[%s11 + $0x20] sm:$0xff]
        %v1537 = vld [vmem:[%s11 + $0x28] sm:$0xff]
        %v1538 = vld [vmem:[%s11 + $0x30] sm:$0xff]
        %v1539 = vld [vmem:[%s11 + $0x38] sm:$0xff]
        %v1540 = vld [vmem:[%s12] sm:$0x1]
        %v1542 = vlaneseq
        %v1543 = vshrl.u32 %v1542, 7
        %v1544 = vsub.s32 0, %v1543
        %v1545 = vrot.slane %v1540, %v1544
        %v1548 = vsel %vm1179, %v1528, 0
        %v1551 = vsel %vm1179, %v1529, 0
        %v1554 = vsel %vm1179, %v1530, 0
        %v1557 = vsel %vm1179, %v1531, 0
        %1559 = vmatprep.subr.mxu0 0.0
        %1560 = vmatpush1.msra.mxu0 %v1532
        %1561 = vmatprep.subr.mxu0 0.0
        %1562 = vmatpush1.msra.mxu0 %v1533
        %1563 = vmatprep.subr.mxu0 0.0
        %1564 = vmatpush1.msra.mxu0 %v1534
        %1565 = vmatprep.subr.mxu0 0.0
        %1566 = vmatpush1.msra.mxu0 %v1535
        %1567 = vmatprep.subr.mxu0 0.0
        %1568 = vmatpush1.msra.mxu0 %v1536
        %1569 = vmatprep.subr.mxu0 0.0
        %1570 = vmatpush1.msra.mxu0 %v1537
        %1571 = vmatprep.subr.mxu0 0.0
        %1572 = vmatpush1.msra.mxu0 %v1538
        %1573 = vmatprep.subr.mxu0 0.0
        %1574 = vmatpush1.msra.mxu0 %v1539
        %1575 = vmatprep.subr.mxu0 0.0
        %1576 = vmatpush1.msra.mxu0 0.0
        %1577 = vmatprep.subr.mxu0 0.0
        %1578 = vmatpush1.msra.mxu0 0.0
        %1579 = vmatprep.subr.mxu0 0.0
        %1580 = vmatpush1.msra.mxu0 0.0
        %1581 = vmatprep.subr.mxu0 0.0
        %1582 = vmatpush1.msra.mxu0 0.0
        %1583 = vmatprep.subr.mxu0 0.0
        %1584 = vmatpush1.msra.mxu0 0.0
        %1585 = vmatprep.subr.mxu0 0.0
        %1586 = vmatpush1.msra.mxu0 0.0
        %1587 = vmatprep.subr.mxu0 0.0
        %1588 = vmatpush1.msra.mxu0 0.0
        %1589 = vmatprep.subr.mxu0 0.0
        %1590 = vmatpush1.msra.mxu0 0.0
        %1591 = vmatprep.subr.mxu0 0.0
        %1592 = vmatpush1.msra.mxu0 0.0
        %1593 = vmatprep.subr.mxu0 0.0
        %1594 = vmatpush1.msra.mxu0 0.0
        %1595 = vmatprep.subr.mxu0 0.0
        %1596 = vmatpush1.msra.mxu0 0.0
        %1597 = vmatprep.subr.mxu0 0.0
        %1598 = vmatpush1.msra.mxu0 0.0
        %1599 = vmatprep.subr.mxu0 0.0
        %1600 = vmatpush1.msra.mxu0 0.0
        %1601 = vmatprep.subr.mxu0 0.0
        %1602 = vmatpush1.msra.mxu0 0.0
        %1603 = vmatprep.subr.mxu0 0.0
        %1604 = vmatpush1.msra.mxu0 0.0
        %1605 = vmatprep.subr.mxu0 0.0
        %1606 = vmatpush1.msra.mxu0 0.0
        %1607 = vmatprep.subr.mxu0 0.0
        %1608 = vmatpush1.msra.mxu0 0.0
        %1609 = vmatprep.subr.mxu0 0.0
        %1610 = vmatpush1.msra.mxu0 0.0
        %1611 = vmatprep.subr.mxu0 0.0
        %1612 = vmatpush1.msra.mxu0 0.0
        %1613 = vmatprep.subr.mxu0 0.0
        %1614 = vmatpush1.msra.mxu0 0.0
        %1615 = vmatprep.subr.mxu0 0.0
        %1616 = vmatpush1.msra.mxu0 0.0
        %1617 = vmatprep.subr.mxu0 0.0
        %1618 = vmatpush1.msra.mxu0 0.0
        %1619 = vmatprep.subr.mxu0 0.0
        %1620 = vmatpush1.msra.mxu0 0.0
        %1621 = vmatprep.subr.mxu0 0.0
        %1622 = vmatpush1.msra.mxu0 0.0
        %1623 = vmatprep.mubr.f32.mxu0 0.0
        %1624 = vmatmul.mubr.f32.gmra.mrb[0].mxu0 %v1548
        %v1625 = vpop.f32.mrb[0].mxu0
        %v1626 = vadd.f32 %v1545, %v1625
        %v1627 = vpop.f32.mrb[0].mxu0
        %1628 = vmatprep.mubr.f32.mxu0 0.0
        %1629 = vmatmul.mubr.f32.gmra.mrb[0].mxu0 %v1551
        %v1630 = vpop.f32.mrb[0].mxu0
        %v1631 = vadd.f32 %v1545, %v1630
        %v1632 = vpop.f32.mrb[0].mxu0
        %1633 = vmatprep.mubr.f32.mxu0 0.0
        %1634 = vmatmul.mubr.f32.gmra.mrb[0].mxu0 %v1554
        %v1635 = vpop.f32.mrb[0].mxu0
        %v1636 = vadd.f32 %v1545, %v1635
        %v1637 = vpop.f32.mrb[0].mxu0
        %1638 = vmatprep.mubr.f32.mxu0 0.0
        %1639 = vmatmul.mubr.f32.gmra.mrb[0].mxu0 %v1557
        %v1640 = vpop.f32.mrb[0].mxu0
        %v1641 = vadd.f32 %v1545, %v1640
        %v1642 = vpop.f32.mrb[0].mxu0
        %1643 = vdwg.mxu0
        %v1644 = vmax.f32 %v1626, 0.0
        %v1645 = vmax.f32 %v1631, 0.0
        %v1646 = vmax.f32 %v1636, 0.0
        %v1647 = vmax.f32 %v1641, 0.0
        %v1648 = vld [vmem:[%s13] sm:$0xff]
        %v1649 = vld [vmem:[%s13 + $0x8] sm:$0xff]
        %v1650 = vld [vmem:[%s13 + $0x10] sm:$0xff]
        %v1651 = vld [vmem:[%s13 + $0x18] sm:$0xff]
        %v1652 = vld [vmem:[%s13 + $0x20] sm:$0xff]
        %v1653 = vld [vmem:[%s13 + $0x28] sm:$0xff]
        %v1654 = vld [vmem:[%s13 + $0x30] sm:$0xff]
        %v1655 = vld [vmem:[%s13 + $0x38] sm:$0xff]
        %v1656 = vld [vmem:[%s13 + $0x40] sm:$0xff]
        %v1657 = vld [vmem:[%s13 + $0x48] sm:$0xff]
        %v1658 = vld [vmem:[%s13 + $0x50] sm:$0xff]
        %v1659 = vld [vmem:[%s13 + $0x58] sm:$0xff]
        %v1660 = vld [vmem:[%s13 + $0x60] sm:$0xff]
        %v1661 = vld [vmem:[%s13 + $0x68] sm:$0xff]
        %v1662 = vld [vmem:[%s13 + $0x70] sm:$0xff]
        %v1663 = vld [vmem:[%s13 + $0x78] sm:$0xff]
        %v1664 = vld [vmem:[%s13 + $0x80] sm:$0xff]
        %v1665 = vld [vmem:[%s13 + $0x88] sm:$0xff]
        %v1666 = vld [vmem:[%s13 + $0x90] sm:$0xff]
        %v1667 = vld [vmem:[%s13 + $0x98] sm:$0xff]
        %v1668 = vld [vmem:[%s13 + $0xa0] sm:$0xff]
        %v1669 = vld [vmem:[%s13 + $0xa8] sm:$0xff]
        %v1670 = vld [vmem:[%s13 + $0xb0] sm:$0xff]
        %v1671 = vld [vmem:[%s13 + $0xb8] sm:$0xff]
        %v1672 = vld [vmem:[%s13 + $0xc0] sm:$0xff]
        %v1673 = vld [vmem:[%s13 + $0xc8] sm:$0xff]
        %v1674 = vld [vmem:[%s13 + $0xd0] sm:$0xff]
        %v1675 = vld [vmem:[%s13 + $0xd8] sm:$0xff]
        %v1676 = vld [vmem:[%s13 + $0xe0] sm:$0xff]
        %v1677 = vld [vmem:[%s13 + $0xe8] sm:$0xff]
        %v1678 = vld [vmem:[%s13 + $0xf0] sm:$0xff]
        %v1679 = vld [vmem:[%s13 + $0xf8] sm:$0xff]
        %v1680 = vld [vmem:[%s13 + $0x100] sm:$0xff]
        %v1681 = vld [vmem:[%s13 + $0x108] sm:$0xff]
        %v1682 = vld [vmem:[%s13 + $0x110] sm:$0xff]
        %v1683 = vld [vmem:[%s13 + $0x118] sm:$0xff]
        %v1684 = vld [vmem:[%s13 + $0x120] sm:$0xff]
        %v1685 = vld [vmem:[%s13 + $0x128] sm:$0xff]
        %v1686 = vld [vmem:[%s13 + $0x130] sm:$0xff]
        %v1687 = vld [vmem:[%s13 + $0x138] sm:$0xff]
        %v1688 = vld [vmem:[%s13 + $0x140] sm:$0xff]
        %v1689 = vld [vmem:[%s13 + $0x148] sm:$0xff]
        %v1690 = vld [vmem:[%s13 + $0x150] sm:$0xff]
        %v1691 = vld [vmem:[%s13 + $0x158] sm:$0xff]
        %v1692 = vld [vmem:[%s13 + $0x160] sm:$0xff]
        %v1693 = vld [vmem:[%s13 + $0x168] sm:$0xff]
        %v1694 = vld [vmem:[%s13 + $0x170] sm:$0xff]
        %v1695 = vld [vmem:[%s13 + $0x178] sm:$0xff]
        %v1696 = vld [vmem:[%s13 + $0x180] sm:$0xff]
        %v1697 = vld [vmem:[%s13 + $0x188] sm:$0xff]
        %v1698 = vld [vmem:[%s13 + $0x190] sm:$0xff]
        %v1699 = vld [vmem:[%s13 + $0x198] sm:$0xff]
        %v1700 = vld [vmem:[%s13 + $0x1a0] sm:$0xff]
        %v1701 = vld [vmem:[%s13 + $0x1a8] sm:$0xff]
        %v1702 = vld [vmem:[%s13 + $0x1b0] sm:$0xff]
        %v1703 = vld [vmem:[%s13 + $0x1b8] sm:$0xff]
        %v1704 = vld [vmem:[%s13 + $0x1c0] sm:$0xff]
        %v1705 = vld [vmem:[%s13 + $0x1c8] sm:$0xff]
        %v1706 = vld [vmem:[%s13 + $0x1d0] sm:$0xff]
        %v1707 = vld [vmem:[%s13 + $0x1d8] sm:$0xff]
        %v1708 = vld [vmem:[%s13 + $0x1e0] sm:$0xff]
        %v1709 = vld [vmem:[%s13 + $0x1e8] sm:$0xff]
        %v1710 = vld [vmem:[%s13 + $0x1f0] sm:$0xff]
        %v1711 = vld [vmem:[%s13 + $0x1f8] sm:$0xff]
        %v1712 = vld [vmem:[%s13 + $0x200] sm:$0xff]
        %v1713 = vld [vmem:[%s13 + $0x208] sm:$0xff]
        %v1714 = vld [vmem:[%s13 + $0x210] sm:$0xff]
        %v1715 = vld [vmem:[%s13 + $0x218] sm:$0xff]
        %v1716 = vld [vmem:[%s13 + $0x220] sm:$0xff]
        %v1717 = vld [vmem:[%s13 + $0x228] sm:$0xff]
        %v1718 = vld [vmem:[%s13 + $0x230] sm:$0xff]
        %v1719 = vld [vmem:[%s13 + $0x238] sm:$0xff]
        %v1720 = vld [vmem:[%s13 + $0x240] sm:$0xff]
        %v1721 = vld [vmem:[%s13 + $0x248] sm:$0xff]
        %v1722 = vld [vmem:[%s13 + $0x250] sm:$0xff]
        %v1723 = vld [vmem:[%s13 + $0x258] sm:$0xff]
        %v1724 = vld [vmem:[%s13 + $0x260] sm:$0xff]
        %v1725 = vld [vmem:[%s13 + $0x268] sm:$0xff]
        %v1726 = vld [vmem:[%s13 + $0x270] sm:$0xff]
        %v1727 = vld [vmem:[%s13 + $0x278] sm:$0xff]
        %v1728 = vld [vmem:[%s13 + $0x280] sm:$0xff]
        %v1729 = vld [vmem:[%s13 + $0x288] sm:$0xff]
        %v1730 = vld [vmem:[%s13 + $0x290] sm:$0xff]
        %v1731 = vld [vmem:[%s13 + $0x298] sm:$0xff]
        %v1732 = vld [vmem:[%s13 + $0x2a0] sm:$0xff]
        %v1733 = vld [vmem:[%s13 + $0x2a8] sm:$0xff]
        %v1734 = vld [vmem:[%s13 + $0x2b0] sm:$0xff]
        %v1735 = vld [vmem:[%s13 + $0x2b8] sm:$0xff]
        %v1736 = vld [vmem:[%s13 + $0x2c0] sm:$0xff]
        %v1737 = vld [vmem:[%s13 + $0x2c8] sm:$0xff]
        %v1738 = vld [vmem:[%s13 + $0x2d0] sm:$0xff]
        %v1739 = vld [vmem:[%s13 + $0x2d8] sm:$0xff]
        %v1740 = vld [vmem:[%s13 + $0x2e0] sm:$0xff]
        %v1741 = vld [vmem:[%s13 + $0x2e8] sm:$0xff]
        %v1742 = vld [vmem:[%s13 + $0x2f0] sm:$0xff]
        %v1743 = vld [vmem:[%s13 + $0x2f8] sm:$0xff]
        %v1744 = vld [vmem:[%s13 + $0x300] sm:$0xff]
        %v1745 = vld [vmem:[%s13 + $0x308] sm:$0xff]
        %v1746 = vld [vmem:[%s13 + $0x310] sm:$0xff]
        %v1747 = vld [vmem:[%s13 + $0x318] sm:$0xff]
        %v1748 = vld [vmem:[%s13 + $0x320] sm:$0xff]
        %v1749 = vld [vmem:[%s13 + $0x328] sm:$0xff]
        %v1750 = vld [vmem:[%s13 + $0x330] sm:$0xff]
        %v1751 = vld [vmem:[%s13 + $0x338] sm:$0xff]
        %v1752 = vld [vmem:[%s13 + $0x340] sm:$0xff]
        %v1753 = vld [vmem:[%s13 + $0x348] sm:$0xff]
        %v1754 = vld [vmem:[%s13 + $0x350] sm:$0xff]
        %v1755 = vld [vmem:[%s13 + $0x358] sm:$0xff]
        %v1756 = vld [vmem:[%s13 + $0x360] sm:$0xff]
        %v1757 = vld [vmem:[%s13 + $0x368] sm:$0xff]
        %v1758 = vld [vmem:[%s13 + $0x370] sm:$0xff]
        %v1759 = vld [vmem:[%s13 + $0x378] sm:$0xff]
        %v1760 = vld [vmem:[%s14] sm:$0x7f]
        %v1762 = vlaneseq
        %v1763 = vshrl.u32 %v1762, 7
        %v1764 = vsub.s32 0, %v1763
        %v1765 = vrot.slane %v1760, %v1764
        %v1766 = vlaneseq
        %v1767 = vshrl.u32 %v1766, 7
        %v1768 = vsub.s32 1, %v1767
        %v1769 = vrot.slane %v1760, %v1768
        %v1770 = vlaneseq
        %v1771 = vshrl.u32 %v1770, 7
        %v1772 = vsub.s32 2, %v1771
        %v1773 = vrot.slane %v1760, %v1772
        %v1774 = vlaneseq
        %v1775 = vshrl.u32 %v1774, 7
        %v1776 = vsub.s32 3, %v1775
        %v1777 = vrot.slane %v1760, %v1776
        %v1778 = vlaneseq
        %v1779 = vshrl.u32 %v1778, 7
        %v1780 = vsub.s32 4, %v1779
        %v1781 = vrot.slane %v1760, %v1780
        %v1782 = vlaneseq
        %v1783 = vshrl.u32 %v1782, 7
        %v1784 = vsub.s32 5, %v1783
        %v1785 = vrot.slane %v1760, %v1784
        %v1786 = vlaneseq
        %v1787 = vshrl.u32 %v1786, 7
        %v1788 = vsub.s32 6, %v1787
        %v1789 = vrot.slane %v1760, %v1788
        %1797 = vmatprep.subr.mxu0 %v1649
        %1798 = vmatpush1.msra.mxu0 %v1648
        %1799 = vmatprep.subr.mxu0 %v1656
        %1800 = vmatpush1.msra.mxu0 %v1655
        %1801 = vmatprep.subr.mxu0 %v1663
        %1802 = vmatpush1.msra.mxu0 %v1662
        %1803 = vmatprep.subr.mxu0 %v1670
        %1804 = vmatpush1.msra.mxu0 %v1669
        %1805 = vmatprep.subr.mxu0 %v1677
        %1806 = vmatpush1.msra.mxu0 %v1676
        %1807 = vmatprep.subr.mxu0 %v1684
        %1808 = vmatpush1.msra.mxu0 %v1683
        %1809 = vmatprep.subr.mxu0 %v1691
        %1810 = vmatpush1.msra.mxu0 %v1690
        %1811 = vmatprep.subr.mxu0 %v1698
        %1812 = vmatpush1.msra.mxu0 %v1697
        %1813 = vmatprep.subr.mxu0 %v1705
        %1814 = vmatpush1.msra.mxu0 %v1704
        %1815 = vmatprep.subr.mxu0 %v1712
        %1816 = vmatpush1.msra.mxu0 %v1711
        %1817 = vmatprep.subr.mxu0 %v1719
        %1818 = vmatpush1.msra.mxu0 %v1718
        %1819 = vmatprep.subr.mxu0 %v1726
        %1820 = vmatpush1.msra.mxu0 %v1725
        %1821 = vmatprep.subr.mxu0 %v1733
        %1822 = vmatpush1.msra.mxu0 %v1732
        %1823 = vmatprep.subr.mxu0 %v1740
        %1824 = vmatpush1.msra.mxu0 %v1739
        %1825 = vmatprep.subr.mxu0 %v1747
        %1826 = vmatpush1.msra.mxu0 %v1746
        %1827 = vmatprep.subr.mxu0 %v1754
        %1828 = vmatpush1.msra.mxu0 %v1753
        %1829 = vmatprep.subr.mxu0 0.0
        %1830 = vmatpush1.msra.mxu0 0.0
        %1831 = vmatprep.subr.mxu0 0.0
        %1832 = vmatpush1.msra.mxu0 0.0
        %1833 = vmatprep.subr.mxu0 0.0
        %1834 = vmatpush1.msra.mxu0 0.0
        %1835 = vmatprep.subr.mxu0 0.0
        %1836 = vmatpush1.msra.mxu0 0.0
        %1837 = vmatprep.subr.mxu0 0.0
        %1838 = vmatpush1.msra.mxu0 0.0
        %1839 = vmatprep.subr.mxu0 0.0
        %1840 = vmatpush1.msra.mxu0 0.0
        %1841 = vmatprep.subr.mxu0 0.0
        %1842 = vmatpush1.msra.mxu0 0.0
        %1843 = vmatprep.subr.mxu0 0.0
        %1844 = vmatpush1.msra.mxu0 0.0
        %1845 = vmatprep.subr.mxu0 0.0
        %1846 = vmatpush1.msra.mxu0 0.0
        %1847 = vmatprep.subr.mxu0 0.0
        %1848 = vmatpush1.msra.mxu0 0.0
        %1849 = vmatprep.subr.mxu0 0.0
        %1850 = vmatpush1.msra.mxu0 0.0
        %1851 = vmatprep.subr.mxu0 0.0
        %1852 = vmatpush1.msra.mxu0 0.0
        %1853 = vmatprep.subr.mxu0 0.0
        %1854 = vmatpush1.msra.mxu0 0.0
        %1855 = vmatprep.subr.mxu0 0.0
        %1856 = vmatpush1.msra.mxu0 0.0
        %1857 = vmatprep.subr.mxu0 0.0
        %1858 = vmatpush1.msra.mxu0 0.0
        %1859 = vmatprep.subr.mxu0 0.0
        %1860 = vmatpush1.msra.mxu0 0.0
        %1861 = vmatprep.mubr.f32.mxu0 0.0
        %1862 = vmatmul.mubr.f32.gmra.mrb[0].mxu0 %v1644
        %v1863 = vpop.f32.mrb[0].mxu0
        %v1864 = vadd.f32 %v1765, %v1863
        %v1865 = vpop.f32.mrb[0].mxu0
        %v1866 = vadd.f32 %v1769, %v1865
        %1867 = vmatprep.mubr.f32.mxu0 0.0
        %1868 = vmatmul.mubr.f32.gmra.mrb[0].mxu0 %v1645
        %v1869 = vpop.f32.mrb[0].mxu0
        %v1870 = vadd.f32 %v1765, %v1869
        %v1871 = vpop.f32.mrb[0].mxu0
        %v1872 = vadd.f32 %v1769, %v1871
        %1873 = vmatprep.mubr.f32.mxu0 0.0
        %1874 = vmatmul.mubr.f32.gmra.mrb[0].mxu0 %v1646
        %v1875 = vpop.f32.mrb[0].mxu0
        %v1876 = vadd.f32 %v1765, %v1875
        %v1877 = vpop.f32.mrb[0].mxu0
        %v1878 = vadd.f32 %v1769, %v1877
        %1879 = vmatprep.mubr.f32.mxu0 0.0
        %1880 = vmatmul.mubr.f32.gmra.mrb[0].mxu0 %v1647
        %v1881 = vpop.f32.mrb[0].mxu0
        %v1882 = vadd.f32 %v1765, %v1881
        %v1883 = vpop.f32.mrb[0].mxu0
        %v1884 = vadd.f32 %v1769, %v1883
        %1885 = vdwg.mxu0
        %1886 = vmatprep.subr.mxu0 %v1651
        %1887 = vmatpush1.msra.mxu0 %v1650
        %1888 = vmatprep.subr.mxu0 %v1658
        %1889 = vmatpush1.msra.mxu0 %v1657
        %1890 = vmatprep.subr.mxu0 %v1665
        %1891 = vmatpush1.msra.mxu0 %v1664
        %1892 = vmatprep.subr.mxu0 %v1672
        %1893 = vmatpush1.msra.mxu0 %v1671
        %1894 = vmatprep.subr.mxu0 %v1679
        %1895 = vmatpush1.msra.mxu0 %v1678
        %1896 = vmatprep.subr.mxu0 %v1686
        %1897 = vmatpush1.msra.mxu0 %v1685
        %1898 = vmatprep.subr.mxu0 %v1693
        %1899 = vmatpush1.msra.mxu0 %v1692
        %1900 = vmatprep.subr.mxu0 %v1700
        %1901 = vmatpush1.msra.mxu0 %v1699
        %1902 = vmatprep.subr.mxu0 %v1707
        %1903 = vmatpush1.msra.mxu0 %v1706
        %1904 = vmatprep.subr.mxu0 %v1714
        %1905 = vmatpush1.msra.mxu0 %v1713
        %1906 = vmatprep.subr.mxu0 %v1721
        %1907 = vmatpush1.msra.mxu0 %v1720
        %1908 = vmatprep.subr.mxu0 %v1728
        %1909 = vmatpush1.msra.mxu0 %v1727
        %1910 = vmatprep.subr.mxu0 %v1735
        %1911 = vmatpush1.msra.mxu0 %v1734
        %1912 = vmatprep.subr.mxu0 %v1742
        %1913 = vmatpush1.msra.mxu0 %v1741
        %1914 = vmatprep.subr.mxu0 %v1749
        %1915 = vmatpush1.msra.mxu0 %v1748
        %1916 = vmatprep.subr.mxu0 %v1756
        %1917 = vmatpush1.msra.mxu0 %v1755
        %1918 = vmatprep.subr.mxu0 0.0
        %1919 = vmatpush1.msra.mxu0 0.0
        %1920 = vmatprep.subr.mxu0 0.0
        %1921 = vmatpush1.msra.mxu0 0.0
        %1922 = vmatprep.subr.mxu0 0.0
        %1923 = vmatpush1.msra.mxu0 0.0
        %1924 = vmatprep.subr.mxu0 0.0
        %1925 = vmatpush1.msra.mxu0 0.0
        %1926 = vmatprep.subr.mxu0 0.0
        %1927 = vmatpush1.msra.mxu0 0.0
        %1928 = vmatprep.subr.mxu0 0.0
        %1929 = vmatpush1.msra.mxu0 0.0
        %1930 = vmatprep.subr.mxu0 0.0
        %1931 = vmatpush1.msra.mxu0 0.0
        %1932 = vmatprep.subr.mxu0 0.0
        %1933 = vmatpush1.msra.mxu0 0.0
        %1934 = vmatprep.subr.mxu0 0.0
        %1935 = vmatpush1.msra.mxu0 0.0
        %1936 = vmatprep.subr.mxu0 0.0
        %1937 = vmatpush1.msra.mxu0 0.0
        %1938 = vmatprep.subr.mxu0 0.0
        %1939 = vmatpush1.msra.mxu0 0.0
        %1940 = vmatprep.subr.mxu0 0.0
        %1941 = vmatpush1.msra.mxu0 0.0
        %1942 = vmatprep.subr.mxu0 0.0
        %1943 = vmatpush1.msra.mxu0 0.0
        %1944 = vmatprep.subr.mxu0 0.0
        %1945 = vmatpush1.msra.mxu0 0.0
        %1946 = vmatprep.subr.mxu0 0.0
        %1947 = vmatpush1.msra.mxu0 0.0
        %1948 = vmatprep.subr.mxu0 0.0
        %1949 = vmatpush1.msra.mxu0 0.0
        %1950 = vmatprep.mubr.f32.mxu0 0.0
        %1951 = vmatmul.mubr.f32.gmra.mrb[0].mxu0 %v1644
        %v1952 = vpop.f32.mrb[0].mxu0
        %v1953 = vadd.f32 %v1773, %v1952
        %v1954 = vpop.f32.mrb[0].mxu0
        %v1955 = vadd.f32 %v1777, %v1954
        %1956 = vmatprep.mubr.f32.mxu0 0.0
        %1957 = vmatmul.mubr.f32.gmra.mrb[0].mxu0 %v1645
        %v1958 = vpop.f32.mrb[0].mxu0
        %v1959 = vadd.f32 %v1773, %v1958
        %v1960 = vpop.f32.mrb[0].mxu0
        %v1961 = vadd.f32 %v1777, %v1960
        %1962 = vmatprep.mubr.f32.mxu0 0.0
        %1963 = vmatmul.mubr.f32.gmra.mrb[0].mxu0 %v1646
        %v1964 = vpop.f32.mrb[0].mxu0
        %v1965 = vadd.f32 %v1773, %v1964
        %v1966 = vpop.f32.mrb[0].mxu0
        %v1967 = vadd.f32 %v1777, %v1966
        %1968 = vmatprep.mubr.f32.mxu0 0.0
        %1969 = vmatmul.mubr.f32.gmra.mrb[0].mxu0 %v1647
        %v1970 = vpop.f32.mrb[0].mxu0
        %v1971 = vadd.f32 %v1773, %v1970
        %v1972 = vpop.f32.mrb[0].mxu0
        %v1973 = vadd.f32 %v1777, %v1972
        %1974 = vdwg.mxu0
        %1975 = vmatprep.subr.mxu0 %v1653
        %1976 = vmatpush1.msra.mxu0 %v1652
        %1977 = vmatprep.subr.mxu0 %v1660
        %1978 = vmatpush1.msra.mxu0 %v1659
        %1979 = vmatprep.subr.mxu0 %v1667
        %1980 = vmatpush1.msra.mxu0 %v1666
        %1981 = vmatprep.subr.mxu0 %v1674
        %1982 = vmatpush1.msra.mxu0 %v1673
        %1983 = vmatprep.subr.mxu0 %v1681
        %1984 = vmatpush1.msra.mxu0 %v1680
        %1985 = vmatprep.subr.mxu0 %v1688
        %1986 = vmatpush1.msra.mxu0 %v1687
        %1987 = vmatprep.subr.mxu0 %v1695
        %1988 = vmatpush1.msra.mxu0 %v1694
        %1989 = vmatprep.subr.mxu0 %v1702
        %1990 = vmatpush1.msra.mxu0 %v1701
        %1991 = vmatprep.subr.mxu0 %v1709
        %1992 = vmatpush1.msra.mxu0 %v1708
        %1993 = vmatprep.subr.mxu0 %v1716
        %1994 = vmatpush1.msra.mxu0 %v1715
        %1995 = vmatprep.subr.mxu0 %v1723
        %1996 = vmatpush1.msra.mxu0 %v1722
        %1997 = vmatprep.subr.mxu0 %v1730
        %1998 = vmatpush1.msra.mxu0 %v1729
        %1999 = vmatprep.subr.mxu0 %v1737
        %2000 = vmatpush1.msra.mxu0 %v1736
        %2001 = vmatprep.subr.mxu0 %v1744
        %2002 = vmatpush1.msra.mxu0 %v1743
        %2003 = vmatprep.subr.mxu0 %v1751
        %2004 = vmatpush1.msra.mxu0 %v1750
        %2005 = vmatprep.subr.mxu0 %v1758
        %2006 = vmatpush1.msra.mxu0 %v1757
        %2007 = vmatprep.subr.mxu0 0.0
        %2008 = vmatpush1.msra.mxu0 0.0
        %2009 = vmatprep.subr.mxu0 0.0
        %2010 = vmatpush1.msra.mxu0 0.0
        %2011 = vmatprep.subr.mxu0 0.0
        %2012 = vmatpush1.msra.mxu0 0.0
        %2013 = vmatprep.subr.mxu0 0.0
        %2014 = vmatpush1.msra.mxu0 0.0
        %2015 = vmatprep.subr.mxu0 0.0
        %2016 = vmatpush1.msra.mxu0 0.0
        %2017 = vmatprep.subr.mxu0 0.0
        %2018 = vmatpush1.msra.mxu0 0.0
        %2019 = vmatprep.subr.mxu0 0.0
        %2020 = vmatpush1.msra.mxu0 0.0
        %2021 = vmatprep.subr.mxu0 0.0
        %2022 = vmatpush1.msra.mxu0 0.0
        %2023 = vmatprep.subr.mxu0 0.0
        %2024 = vmatpush1.msra.mxu0 0.0
        %2025 = vmatprep.subr.mxu0 0.0
        %2026 = vmatpush1.msra.mxu0 0.0
        %2027 = vmatprep.subr.mxu0 0.0
        %2028 = vmatpush1.msra.mxu0 0.0
        %2029 = vmatprep.subr.mxu0 0.0
        %2030 = vmatpush1.msra.mxu0 0.0
        %2031 = vmatprep.subr.mxu0 0.0
        %2032 = vmatpush1.msra.mxu0 0.0
        %2033 = vmatprep.subr.mxu0 0.0
        %2034 = vmatpush1.msra.mxu0 0.0
        %2035 = vmatprep.subr.mxu0 0.0
        %2036 = vmatpush1.msra.mxu0 0.0
        %2037 = vmatprep.subr.mxu0 0.0
        %2038 = vmatpush1.msra.mxu0 0.0
        %2039 = vmatprep.mubr.f32.mxu0 0.0
        %2040 = vmatmul.mubr.f32.gmra.mrb[0].mxu0 %v1644
        %v2041 = vpop.f32.mrb[0].mxu0
        %v2042 = vadd.f32 %v1781, %v2041
        %v2043 = vpop.f32.mrb[0].mxu0
        %v2044 = vadd.f32 %v1785, %v2043
        %2045 = vmatprep.mubr.f32.mxu0 0.0
        %2046 = vmatmul.mubr.f32.gmra.mrb[0].mxu0 %v1645
        %v2047 = vpop.f32.mrb[0].mxu0
        %v2048 = vadd.f32 %v1781, %v2047
        %v2049 = vpop.f32.mrb[0].mxu0
        %v2050 = vadd.f32 %v1785, %v2049
        %2051 = vmatprep.mubr.f32.mxu0 0.0
        %2052 = vmatmul.mubr.f32.gmra.mrb[0].mxu0 %v1646
        %v2053 = vpop.f32.mrb[0].mxu0
        %v2054 = vadd.f32 %v1781, %v2053
        %v2055 = vpop.f32.mrb[0].mxu0
        %v2056 = vadd.f32 %v1785, %v2055
        %2057 = vmatprep.mubr.f32.mxu0 0.0
        %2058 = vmatmul.mubr.f32.gmra.mrb[0].mxu0 %v1647
        %v2059 = vpop.f32.mrb[0].mxu0
        %v2060 = vadd.f32 %v1781, %v2059
        %v2061 = vpop.f32.mrb[0].mxu0
        %v2062 = vadd.f32 %v1785, %v2061
        %2063 = vdwg.mxu0
        %2064 = vmatprep.subr.mxu0 0.0
        %2065 = vmatpush1.msra.mxu0 %v1654
        %2066 = vmatprep.subr.mxu0 0.0
        %2067 = vmatpush1.msra.mxu0 %v1661
        %2068 = vmatprep.subr.mxu0 0.0
        %2069 = vmatpush1.msra.mxu0 %v1668
        %2070 = vmatprep.subr.mxu0 0.0
        %2071 = vmatpush1.msra.mxu0 %v1675
        %2072 = vmatprep.subr.mxu0 0.0
        %2073 = vmatpush1.msra.mxu0 %v1682
        %2074 = vmatprep.subr.mxu0 0.0
        %2075 = vmatpush1.msra.mxu0 %v1689
        %2076 = vmatprep.subr.mxu0 0.0
        %2077 = vmatpush1.msra.mxu0 %v1696
        %2078 = vmatprep.subr.mxu0 0.0
        %2079 = vmatpush1.msra.mxu0 %v1703
        %2080 = vmatprep.subr.mxu0 0.0
        %2081 = vmatpush1.msra.mxu0 %v1710
        %2082 = vmatprep.subr.mxu0 0.0
        %2083 = vmatpush1.msra.mxu0 %v1717
        %2084 = vmatprep.subr.mxu0 0.0
        %2085 = vmatpush1.msra.mxu0 %v1724
        %2086 = vmatprep.subr.mxu0 0.0
        %2087 = vmatpush1.msra.mxu0 %v1731
        %2088 = vmatprep.subr.mxu0 0.0
        %2089 = vmatpush1.msra.mxu0 %v1738
        %2090 = vmatprep.subr.mxu0 0.0
        %2091 = vmatpush1.msra.mxu0 %v1745
        %2092 = vmatprep.subr.mxu0 0.0
        %2093 = vmatpush1.msra.mxu0 %v1752
        %2094 = vmatprep.subr.mxu0 0.0
        %2095 = vmatpush1.msra.mxu0 %v1759
        %2096 = vmatprep.subr.mxu0 0.0
        %2097 = vmatpush1.msra.mxu0 0.0
        %2098 = vmatprep.subr.mxu0 0.0
        %2099 = vmatpush1.msra.mxu0 0.0
        %2100 = vmatprep.subr.mxu0 0.0
        %2101 = vmatpush1.msra.mxu0 0.0
        %2102 = vmatprep.subr.mxu0 0.0
        %2103 = vmatpush1.msra.mxu0 0.0
        %2104 = vmatprep.subr.mxu0 0.0
        %2105 = vmatpush1.msra.mxu0 0.0
        %2106 = vmatprep.subr.mxu0 0.0
        %2107 = vmatpush1.msra.mxu0 0.0
        %2108 = vmatprep.subr.mxu0 0.0
        %2109 = vmatpush1.msra.mxu0 0.0
        %2110 = vmatprep.subr.mxu0 0.0
        %2111 = vmatpush1.msra.mxu0 0.0
        %2112 = vmatprep.subr.mxu0 0.0
        %2113 = vmatpush1.msra.mxu0 0.0
        %2114 = vmatprep.subr.mxu0 0.0
        %2115 = vmatpush1.msra.mxu0 0.0
        %2116 = vmatprep.subr.mxu0 0.0
        %2117 = vmatpush1.msra.mxu0 0.0
        %2118 = vmatprep.subr.mxu0 0.0
        %2119 = vmatpush1.msra.mxu0 0.0
        %2120 = vmatprep.subr.mxu0 0.0
        %2121 = vmatpush1.msra.mxu0 0.0
        %2122 = vmatprep.subr.mxu0 0.0
        %2123 = vmatpush1.msra.mxu0 0.0
        %2124 = vmatprep.subr.mxu0 0.0
        %2125 = vmatpush1.msra.mxu0 0.0
        %2126 = vmatprep.subr.mxu0 0.0
        %2127 = vmatpush1.msra.mxu0 0.0
        %2128 = vmatprep.mubr.f32.mxu0 0.0
        %2129 = vmatmul.mubr.f32.gmra.mrb[0].mxu0 %v1644
        %v2130 = vpop.f32.mrb[0].mxu0
        %v2131 = vadd.f32 %v1789, %v2130
        %v2132 = vpop.f32.mrb[0].mxu0
        %2133 = vmatprep.mubr.f32.mxu0 0.0
        %2134 = vmatmul.mubr.f32.gmra.mrb[0].mxu0 %v1645
        %v2135 = vpop.f32.mrb[0].mxu0
        %v2136 = vadd.f32 %v1789, %v2135
        %v2137 = vpop.f32.mrb[0].mxu0
        %2138 = vmatprep.mubr.f32.mxu0 0.0
        %2139 = vmatmul.mubr.f32.gmra.mrb[0].mxu0 %v1646
        %v2140 = vpop.f32.mrb[0].mxu0
        %v2141 = vadd.f32 %v1789, %v2140
        %v2142 = vpop.f32.mrb[0].mxu0
        %2143 = vmatprep.mubr.f32.mxu0 0.0
        %2144 = vmatmul.mubr.f32.gmra.mrb[0].mxu0 %v1647
        %v2145 = vpop.f32.mrb[0].mxu0
        %v2146 = vadd.f32 %v1789, %v2145
        %v2147 = vpop.f32.mrb[0].mxu0
        %2148 = vdwg.mxu0
        %v2149 = vsub.f32 0.0, %v1864
        %v2150 = vsub.f32 0.0, %v1866
        %v2151 = vsub.f32 0.0, %v1953
        %v2152 = vsub.f32 0.0, %v1955
        %v2153 = vsub.f32 0.0, %v2042
        %v2154 = vsub.f32 0.0, %v2044
        %v2155 = vsub.f32 0.0, %v2131
        %v2156 = vsub.f32 0.0, %v1870
        %v2157 = vsub.f32 0.0, %v1872
        %v2158 = vsub.f32 0.0, %v1959
        %v2159 = vsub.f32 0.0, %v1961
        %v2160 = vsub.f32 0.0, %v2048
        %v2161 = vsub.f32 0.0, %v2050
        %v2162 = vsub.f32 0.0, %v2136
        %v2163 = vsub.f32 0.0, %v1876
        %v2164 = vsub.f32 0.0, %v1878
        %v2165 = vsub.f32 0.0, %v1965
        %v2166 = vsub.f32 0.0, %v1967
        %v2167 = vsub.f32 0.0, %v2054
        %v2168 = vsub.f32 0.0, %v2056
        %v2169 = vsub.f32 0.0, %v2141
        %v2170 = vsub.f32 0.0, %v1882
        %v2171 = vsub.f32 0.0, %v1884
        %v2172 = vsub.f32 0.0, %v1971
        %v2173 = vsub.f32 0.0, %v1973
        %v2174 = vsub.f32 0.0, %v2060
        %v2175 = vsub.f32 0.0, %v2062
        %v2176 = vsub.f32 0.0, %v2146
        %v2177 = vmul.f32 %v2149, 1.442695
        %v2178 = vpow.pop %v2177
        %v2179 = vmul.f32 %v2150, 1.442695
        %v2180 = vpow.pop %v2179
        %v2181 = vmul.f32 %v2151, 1.442695
        %v2182 = vpow.pop %v2181
        %v2183 = vmul.f32 %v2152, 1.442695
        %v2184 = vpow.pop %v2183
        %v2185 = vmul.f32 %v2153, 1.442695
        %v2186 = vpow.pop %v2185
        %v2187 = vmul.f32 %v2154, 1.442695
        %v2188 = vpow.pop %v2187
        %v2189 = vmul.f32 %v2155, 1.442695
        %v2190 = vpow.pop %v2189
        %v2191 = vmul.f32 %v2156, 1.442695
        %v2192 = vpow.pop %v2191
        %v2193 = vmul.f32 %v2157, 1.442695
        %v2194 = vpow.pop %v2193
        %v2195 = vmul.f32 %v2158, 1.442695
        %v2196 = vpow.pop %v2195
        %v2197 = vmul.f32 %v2159, 1.442695
        %v2198 = vpow.pop %v2197
        %v2199 = vmul.f32 %v2160, 1.442695
        %v2200 = vpow.pop %v2199
        %v2201 = vmul.f32 %v2161, 1.442695
        %v2202 = vpow.pop %v2201
        %v2203 = vmul.f32 %v2162, 1.442695
        %v2204 = vpow.pop %v2203
        %v2205 = vmul.f32 %v2163, 1.442695
        %v2206 = vpow.pop %v2205
        %v2207 = vmul.f32 %v2164, 1.442695
        %v2208 = vpow.pop %v2207
        %v2209 = vmul.f32 %v2165, 1.442695
        %v2210 = vpow.pop %v2209
        %v2211 = vmul.f32 %v2166, 1.442695
        %v2212 = vpow.pop %v2211
        %v2213 = vmul.f32 %v2167, 1.442695
        %v2214 = vpow.pop %v2213
        %v2215 = vmul.f32 %v2168, 1.442695
        %v2216 = vpow.pop %v2215
        %v2217 = vmul.f32 %v2169, 1.442695
        %v2218 = vpow.pop %v2217
        %v2219 = vmul.f32 %v2170, 1.442695
        %v2220 = vpow.pop %v2219
        %v2221 = vmul.f32 %v2171, 1.442695
        %v2222 = vpow.pop %v2221
        %v2223 = vmul.f32 %v2172, 1.442695
        %v2224 = vpow.pop %v2223
        %v2225 = vmul.f32 %v2173, 1.442695
        %v2226 = vpow.pop %v2225
        %v2227 = vmul.f32 %v2174, 1.442695
        %v2228 = vpow.pop %v2227
        %v2229 = vmul.f32 %v2175, 1.442695
        %v2230 = vpow.pop %v2229
        %v2231 = vmul.f32 %v2176, 1.442695
        %v2232 = vpow.pop %v2231
        %v2233 = vadd.f32 %v2178, 1.0
        %v2234 = vadd.f32 %v2180, 1.0
        %v2235 = vadd.f32 %v2182, 1.0
        %v2236 = vadd.f32 %v2184, 1.0
        %v2237 = vadd.f32 %v2186, 1.0
        %v2238 = vadd.f32 %v2188, 1.0
        %v2239 = vadd.f32 %v2190, 1.0
        %v2240 = vadd.f32 %v2192, 1.0
        %v2241 = vadd.f32 %v2194, 1.0
        %v2242 = vadd.f32 %v2196, 1.0
        %v2243 = vadd.f32 %v2198, 1.0
        %v2244 = vadd.f32 %v2200, 1.0
        %v2245 = vadd.f32 %v2202, 1.0
        %v2246 = vadd.f32 %v2204, 1.0
        %v2247 = vadd.f32 %v2206, 1.0
        %v2248 = vadd.f32 %v2208, 1.0
        %v2249 = vadd.f32 %v2210, 1.0
        %v2250 = vadd.f32 %v2212, 1.0
        %v2251 = vadd.f32 %v2214, 1.0
        %v2252 = vadd.f32 %v2216, 1.0
        %v2253 = vadd.f32 %v2218, 1.0
        %v2254 = vadd.f32 %v2220, 1.0
        %v2255 = vadd.f32 %v2222, 1.0
        %v2256 = vadd.f32 %v2224, 1.0
        %v2257 = vadd.f32 %v2226, 1.0
        %v2258 = vadd.f32 %v2228, 1.0
        %v2259 = vadd.f32 %v2230, 1.0
        %v2260 = vadd.f32 %v2232, 1.0
        %v2261 = vrcp.pop %v2233
        %v2262 = vrcp.pop %v2234
        %v2263 = vrcp.pop %v2235
        %v2264 = vrcp.pop %v2236
        %v2265 = vrcp.pop %v2237
        %v2266 = vrcp.pop %v2238
        %v2267 = vrcp.pop %v2239
        %v2268 = vrcp.pop %v2240
        %v2269 = vrcp.pop %v2241
        %v2270 = vrcp.pop %v2242
        %v2271 = vrcp.pop %v2243
        %v2272 = vrcp.pop %v2244
        %v2273 = vrcp.pop %v2245
        %v2274 = vrcp.pop %v2246
        %v2275 = vrcp.pop %v2247
        %v2276 = vrcp.pop %v2248
        %v2277 = vrcp.pop %v2249
        %v2278 = vrcp.pop %v2250
        %v2279 = vrcp.pop %v2251
        %v2280 = vrcp.pop %v2252
        %v2281 = vrcp.pop %v2253
        %v2282 = vrcp.pop %v2254
        %v2283 = vrcp.pop %v2255
        %v2284 = vrcp.pop %v2256
        %v2285 = vrcp.pop %v2257
        %v2286 = vrcp.pop %v2258
        %v2287 = vrcp.pop %v2259
        %v2288 = vrcp.pop %v2260
        %2289 = vst [vmem:[%s541] sm:$0xff] %v2261
        %2290 = vst [vmem:[%s541 + $0x8] sm:$0xff] %v2262
        %2291 = vst [vmem:[%s541 + $0x10] sm:$0xff] %v2263
        %2292 = vst [vmem:[%s541 + $0x18] sm:$0xff] %v2264
        %2293 = vst [vmem:[%s541 + $0x20] sm:$0xff] %v2265
        %2294 = vst [vmem:[%s541 + $0x28] sm:$0xff] %v2266
        %2295 = vst.msk [vmem:[%s541 + $0x30] sm:$0xff] %vm695, %v2267
        %2296 = vst [vmem:[%s541 + $0x38] sm:$0xff] %v2268
        %2297 = vst [vmem:[%s541 + $0x40] sm:$0xff] %v2269
        %2298 = vst [vmem:[%s541 + $0x48] sm:$0xff] %v2270
        %2299 = vst [vmem:[%s541 + $0x50] sm:$0xff] %v2271
        %2300 = vst [vmem:[%s541 + $0x58] sm:$0xff] %v2272
        %2301 = vst [vmem:[%s541 + $0x60] sm:$0xff] %v2273
        %2302 = vst.msk [vmem:[%s541 + $0x68] sm:$0xff] %vm695, %v2274
        %2303 = vst [vmem:[%s541 + $0x70] sm:$0xff] %v2275
        %2304 = vst [vmem:[%s541 + $0x78] sm:$0xff] %v2276
        %2305 = vst [vmem:[%s541 + $0x80] sm:$0xff] %v2277
        %2306 = vst [vmem:[%s541 + $0x88] sm:$0xff] %v2278
        %2307 = vst [vmem:[%s541 + $0x90] sm:$0xff] %v2279
        %2308 = vst [vmem:[%s541 + $0x98] sm:$0xff] %v2280
        %2309 = vst.msk [vmem:[%s541 + $0xa0] sm:$0xff] %vm695, %v2281
        %2310 = vst [vmem:[%s541 + $0xa8] sm:$0xff] %v2282
        %2311 = vst [vmem:[%s541 + $0xb0] sm:$0xff] %v2283
        %2312 = vst [vmem:[%s541 + $0xb8] sm:$0xff] %v2284
        %2313 = vst [vmem:[%s541 + $0xc0] sm:$0xff] %v2285
        %2314 = vst [vmem:[%s541 + $0xc8] sm:$0xff] %v2286
        %2315 = vst [vmem:[%s541 + $0xd0] sm:$0xff] %v2287
        %2316 = vst.msk [vmem:[%s541 + $0xd8] sm:$0xff] %vm695, %v2288
        %s2317 = smul.u32 4, %s31
        %p2318 = scmp.lt.s32.totalorder %s2317, 7
        %s2319 = scalar_select %p2318, %s2317, 7
        %s2320 = smul.addr %s2319, 8
        %s2321 = scalar_lea.vmem %s15, %s2320
        %s2322 = sand.u32 %s390, 1
        %s2323 = scalar_lea.sflag [#allocation3], %s2322
        %s2324 = sand.u32 %s390, 1
        %s2325 = smul.addr %s2324, 224
        %s2326 = scalar_lea.vmem [#allocation2], %s2325
        // Predicated region
        $region81: #{autoencoder_forward.1} parent=79 // pred_check
          %p2327 = pneg %p374
        $region82: #{autoencoder_forward.1} parent=79 // pred_check_branch
          %2329 = sbr.rel (%p2327) target = $region84
        $region83: #{autoencoder_forward.1} parent=79 // pred_region
          %s2330 = smul.u32 4, %s31
        $region84: #{autoencoder_forward.1} parent=79 // pred_fallthru
          _
        // Predicated region
        $region85: #{autoencoder_forward.1} parent=79 // pred_check
          %p2331 = pneg %p400
        $region86: #{autoencoder_forward.1} parent=79 // pred_check_branch
          %2333 = sbr.rel (%p2331) target = $region88
        $region87: #{autoencoder_forward.1} parent=79 // pred_region
          %s2334 = smul.u32 4, %s31
          %s2336 = ssub.s32 3584, 3584
          %2337 = vsyncadd %s2323, %s2336
          %s2338 = smul.addr %s2334, 7
          %s2339 = smul.addr %s2338, 128
          %s2340 = scalar_lea.hbm %s16, %s2339
          %s2341 = sshll.u32 %s2326, 4
          %s2342 = int_to_ptr.vmem [resolvable:$true] %s2341
          %2347 = dma.vmem_to_hbm [thread:$0]  %s2342, 3584, %s2340, %s2323, 896, 896, 56
        $region88: #{autoencoder_forward.1} parent=79 // pred_fallthru
          _
      $region80: #{autoencoder_forward.1} parent=5 // pred_fallthru
        _
      %p2348 = scmp.le.s32.totalorder 2, %s26
      // Predicated region
      $region89: #{autoencoder_forward.1} parent=5 // pred_check
        %p2349 = pneg %p2348
      $region90: #{autoencoder_forward.1} parent=5 // pred_check_branch
        %2351 = sbr.rel (%p2349) target = $region92
      $region91: #{autoencoder_forward.1} parent=5 // pred_region
        %s2352 = ssub.s32 %s26, 2
        // Predicated region
        $region93: #{autoencoder_forward.1} parent=91 // pred_check
          %p2353 = pneg %p380
        $region94: #{autoencoder_forward.1} parent=91 // pred_check_branch
          %2355 = sbr.rel (%p2353) target = $region96
        $region95: #{autoencoder_forward.1} parent=91 // pred_region
          %s2356 = smul.u32 4, %s32
          %p2357 = scmp.lt.s32.totalorder %s2356, 7
          %s2358 = scalar_select %p2357, %s2356, 7
          %s2359 = smul.addr %s2358, 8
          %s2360 = scalar_lea.vmem %s15, %s2359
        $region96: #{autoencoder_forward.1} parent=91 // pred_fallthru
          _
        // Predicated region
        $region97: #{autoencoder_forward.1} parent=91 // pred_check
          %p2361 = pneg %p406
        $region98: #{autoencoder_forward.1} parent=91 // pred_check_branch
          %2363 = sbr.rel (%p2361) target = $region100
        $region99: #{autoencoder_forward.1} parent=91 // pred_region
          %s2364 = sand.u32 %s391, 1
          %s2365 = scalar_lea.sflag [#allocation3], %s2364
          %s2366 = sand.u32 %s391, 1
          %s2367 = smul.addr %s2366, 224
          %s2368 = scalar_lea.vmem [#allocation2], %s2367
          %2369 = dma.done %s2365, 3584
        $region100: #{autoencoder_forward.1} parent=91 // pred_fallthru
          _
      $region92: #{autoencoder_forward.1} parent=5 // pred_fallthru
        _
    $region6: #{autoencoder_forward.1} parent=1 // loop_footer
      %s30 = sadd.s32 1, %s26
    $region7: #{autoencoder_forward.1} parent=1 // loop_footer_branch
      %25 = sbr.rel target = $region3
    $region8: #{autoencoder_forward.1} parent=1 // loop_exit
      _
    %2370 = vsyncpa [#allocation3], 1
    %s2371 = scalar_lea.sflag [#allocation3], 1
    %2372 = vsyncpa %s2371, 1

</llo_original>
